<compile_context>
chip_gen: v7x
topology: tpu7x:2x2x1
jax: 0.10.0
libtpu: 0.0.40
codegen_flags: <defaults>
</compile_context>

<pallas_src>
import functools

import jax
import jax.numpy as jnp
from jax import lax
from jax.experimental import pallas as pl
from jax.experimental.pallas import tpu as pltpu

_BN_EPS = 1e-5
_HALO = 8  # one sublane group; holds the (K-1)//2 = 7 halo rows, aligned


def _round_up(x, m):
    return (x + m - 1) // m * m


def _vmem_capacity_bytes():
    try:
        return int(pltpu.get_tpu_info().vmem_capacity_bytes)
    except Exception:
        return 64 * 2**20                      # v7x-safe conservative fallback


def _p1_workset_bytes(tT, C, K):
    x_io = 2 * tT * C * 2                      # x tile, bf16, double buffered
    h_io = 2 * tT * C * 2                      # h tile, bf16, double buffered
    halo_io = 2 * 2 * (_HALO * C * 2 + _HALO * 2)
    mask_io = 2 * tT * 2
    weights = 2 * (2 * C * C * 2 + 2 * C * 4 + K * C * 4)
    scratch = (tT + 2 * _HALO) * C * 4 + _HALO * C * 4
    interm = 24 * tT * C                       # ab/g/accumulators (f32, compiler managed)
    return x_io + h_io + halo_io + mask_io + weights + scratch + interm


def _pick_time_tile(T, C, K, vmem_cap):
    """Largest time tile whose estimated workset fits ~1/3 of this chip's VMEM."""
    t_hi = max(8, _round_up(T, 8))
    budget = max(2 * 2**20, vmem_cap // 3)
    for cand in (1024, 512, 256, 128, 64, 32, 16, 8):
        if cand <= t_hi and _p1_workset_bytes(cand, C, K) <= budget:
            return cand
    return 8


def _pick_row_tile(rows, C, vmem_cap):
    """Pass-2 row tile: 512-1024 rows, never tiny, capped by VMEM budget."""
    rt = 1024 if vmem_cap >= 96 * 2**20 else 512
    while rt > 8 and rt * C * 20 + 2 * C * C * 2 > max(2 * 2**20, vmem_cap // 4):
        rt //= 2
    return min(rt, rows)                       # rows is always a multiple of 8


def _vmem_limit(workset_bytes, vmem_cap):
    hi = (vmem_cap * 3) // 4                   # <=48 MiB on 64 MiB parts, <=96 MiB on 128 MiB
    return int(min(hi, max(16 * 2**20, 4 * workset_bytes)))


# ---------------------------------------------------------------------------
# Pass 1: masked pointwise_conv1 + GLU + depthwise conv + per-tile BN partials
# ---------------------------------------------------------------------------
def _conv1_glu_dw_kernel(x_ref, xn_ref, m_ref, mn_ref, w1_ref, b1_ref, wd_ref,
                         h_ref, s1_ref, m2_ref, gp_ref, carry_ref, *, T, tT):
    C = x_ref.shape[-1]
    K = wd_ref.shape[0]
    pad = (K - 1) // 2
    base = _HALO - pad                          # first tap offset inside gp (1 for K=15)
    t = pl.program_id(1)

    # Left halo = previous time tile's last 8 g rows; zeros at the sequence start.
    @pl.when(t == 0)
    def _():
        carry_ref[...] = jnp.zeros_like(carry_ref)

    partial_tail = (T % tT) != 0
    if partial_tail:
        row = t * tT + lax.broadcasted_iota(jnp.int32, (tT, 1), 0)
        valid = (row < T).astype(jnp.float32)   # rows past the true T (wrapper padding)
    else:
        valid = None

    # masked_fill_(~mask_pad, 0) -> pointwise_conv1 (both GLU halves in ONE MXU
    # matmul, f32 accumulation) -> GLU.  mask is exactly 0/1, bf16 product exact.
    xm = x_ref[...].reshape(tT, C) * m_ref[...].reshape(tT, 1)
    ab = jnp.dot(xm, w1_ref[...], preferred_element_type=jnp.float32) + b1_ref[...]
    g = ab[:, :C] * jax.nn.sigmoid(ab[:, C:])                      # (tT, C) f32
    if partial_tail:
        g = g * valid        # padded tail rows behave like the conv's zero padding

    # Right halo: first 8 rows of the NEXT tile, recomputed (tiny 8-row matmul).
    xn = xn_ref[...].reshape(_HALO, C) * mn_ref[...].reshape(_HALO, 1)
    abn = jnp.dot(xn, w1_ref[...], preferred_element_type=jnp.float32) + b1_ref[...]
    gn = abn[:, :C] * jax.nn.sigmoid(abn[:, C:])
    rown = (t + 1) * tT + lax.broadcasted_iota(jnp.int32, (_HALO, 1), 0)
    gn = gn * (rown < T).astype(jnp.float32)    # zero past the sequence end

    # Assemble the sublane-aligned halo scratch (all three stores 8-aligned).
    gp_ref[0:_HALO, :] = carry_ref[...]
    gp_ref[_HALO:_HALO + tT, :] = g
    gp_ref[_HALO + tT:_HALO + tT + _HALO, :] = gn
    carry_ref[...] = g[tT - _HALO:tT, :]        # next step's left halo

    # Depthwise conv (kernel K, 'same', groups=C): static-unrolled tap loop,
    # two interleaved f32 accumulators to break the serial VPU add chain.
    # NOTE: a further win is rebuilding the 15 sublane-shifted taps from 3
    # aligned row groups with pltpu.roll+select (XLU) instead of 15 shifted
    # VMEM reloads; kept as the simple proven form here.
    wd = wd_ref[...]
    acc0 = gp_ref[base:base + tT, :] * wd[0:1, :]
    acc1 = gp_ref[base + 1:base + 1 + tT, :] * wd[1:2, :]
    for k in range(2, K):
        term = gp_ref[base + k:base + k + tT, :] * wd[k:k + 1, :]
        if k % 2 == 0:
            acc0 = acc0 + term
        else:
            acc1 = acc1 + term
    h = acc0 + acc1        # depthwise bias omitted: it cancels exactly under BatchNorm
    h_ref[...] = h.reshape(1, tT, C).astype(h_ref.dtype)

    # Per-tile masked BatchNorm partials (two-pass: sum, then centered M2).
    if partial_tail:
        s1 = jnp.sum(h * valid, axis=0, keepdims=True)
        cnt = jnp.maximum(jnp.sum(valid), 1.0)
        mu = s1 / cnt
        cen = (h - mu) * valid
    else:
        s1 = jnp.sum(h, axis=0, keepdims=True)
        mu = s1 * (1.0 / tT)
        cen = h - mu
    m2 = jnp.sum(cen * cen, axis=0, keepdims=True)
    s1_ref[...] = s1.reshape(1, 1, 1, C)
    m2_ref[...] = m2.reshape(1, 1, 1, C)


# ---------------------------------------------------------------------------
# Pass 2: folded BatchNorm + ReLU + pointwise_conv2 + output masking
# ---------------------------------------------------------------------------
def _bn_relu_conv2_kernel(h_ref, mask_ref, scale_ref, shift_ref, w2_ref, b2_ref,
                          out_ref):
    # BatchNorm folded to per-channel scale/shift (f32), fused with the ReLU.
    y = jnp.maximum(h_ref[...].astype(jnp.float32) * scale_ref[...] + shift_ref[...],
                    0.0)
    w2 = w2_ref[...]
    o = jnp.dot(y.astype(w2.dtype), w2, preferred_element_type=jnp.float32)
    o = o + b2_ref[...]
    out_ref[...] = o * mask_ref[...]            # masked_fill_(~mask_pad, 0)


@functools.partial(jax.jit, static_argnames=("compute_dtype",))
def conv_module_forward(x, mask_pad, params, *, compute_dtype=jnp.bfloat16):
    """ConvolutionModule.forward.  x: (B, T, C) f32, mask_pad: (B, 1, T) bool."""
    B, T, C = x.shape
    K = params["wd"].shape[0]
    assert K % 2 == 1 and (K - 1) // 2 <= _HALO - 1

    vmem_cap = _vmem_capacity_bytes()
    tT = _pick_time_tile(T, C, K, vmem_cap)
    Tp = _round_up(T, tT)
    nT = Tp // tT

    # Wrapper-side casts / padding: bf16 matmul operands, time padded to Tp.
    mask = jnp.transpose(mask_pad, (0, 2, 1)).astype(compute_dtype)    # (B, T, 1)
    x_c = x.astype(compute_dtype)
    if Tp != T:
        x_c = jnp.pad(x_c, ((0, 0), (0, Tp - T), (0, 0)))
        mask = jnp.pad(mask, ((0, 0), (0, Tp - T), (0, 0)))

    w1 = params["w1"].astype(compute_dtype)        # (C, 2C) fused GLU weight
    b1 = params["b1"].astype(jnp.float32)          # (1, 2C)
    wd = params["wd"].astype(jnp.float32)          # (K, C)
    w2 = params["w2"].astype(compute_dtype)        # (C, C)
    b2 = params["b2"].astype(jnp.float32)          # (1, C)

    # ---------------- pass 1: grid over (batch, time tiles) ------------------
    nblk8 = Tp // _HALO
    cur = lambda b, t: (b, t, 0)
    nxt = lambda b, t: (b, jnp.minimum((t + 1) * (tT // _HALO), nblk8 - 1), 0)
    const2 = lambda b, t: (0, 0)
    stat = lambda b, t: (b, t, 0, 0)

    ws1 = _p1_workset_bytes(tT, C, K)
    kern1 = functools.partial(_conv1_glu_dw_kernel, T=T, tT=tT)
    h, s1_p, m2_p = pl.pallas_call(
        kern1,
        grid=(B, nT),
        in_specs=[
            pl.BlockSpec((1, tT, C), cur),         # x, current time tile
            pl.BlockSpec((1, _HALO, C), nxt),      # x, next tile's head (right halo)
            pl.BlockSpec((1, tT, 1), cur),         # mask, current
            pl.BlockSpec((1, _HALO, 1), nxt),      # mask, next tile's head
            pl.BlockSpec((C, 2 * C), const2),      # w1 (VMEM resident across grid)
            pl.BlockSpec((1, 2 * C), const2),      # b1
            pl.BlockSpec((K, C), const2),          # wd
        ],
        out_specs=(
            pl.BlockSpec((1, tT, C), cur),         # depthwise output h (bf16)
            pl.BlockSpec((1, 1, 1, C), stat),      # per-tile masked sum
            pl.BlockSpec((1, 1, 1, C), stat),      # per-tile centered M2
        ),
        out_shape=(
            jax.ShapeDtypeStruct((B, Tp, C), compute_dtype),
            jax.ShapeDtypeStruct((B, nT, 1, C), jnp.float32),
            jax.ShapeDtypeStruct((B, nT, 1, C), jnp.float32),
        ),
        scratch_shapes=[pltpu.VMEM((tT + 2 * _HALO, C), jnp.float32),   # halo scratch
                        pltpu.VMEM((_HALO, C), jnp.float32)],           # left-halo carry
        compiler_params=pltpu.CompilerParams(
            dimension_semantics=("parallel", "arbitrary"),
            vmem_limit_bytes=_vmem_limit(ws1, vmem_cap)),
        cost_estimate=pl.CostEstimate(
            flops=int(2 * B * (Tp + _HALO * nT) * C * 2 * C
                      + 2 * B * Tp * C * K + 10 * B * Tp * C),
            transcendentals=int(B * (Tp + _HALO * nT) * C),
            bytes_accessed=int(B * Tp * C * 4 + B * Tp * 4
                               + 2 * C * C * 2 + (K + 4) * C * 4)),
    )(x_c, x_c, mask, mask, w1, b1, wd)

    # ----- combine partials Chan-style, fold BN into per-channel scale/shift -
    s1 = s1_p.reshape(B, nT, C)
    m2 = m2_p.reshape(B, nT, C)
    cnt = jnp.minimum(jnp.float32(T) - jnp.arange(nT, dtype=jnp.float32) * tT,
                      jnp.float32(tT))                       # per-tile valid rows (>=1)
    total = float(B * T)
    mean = jnp.sum(s1, axis=(0, 1)) / total                  # (C,)
    mu_bt = s1 / cnt[None, :, None]
    M2 = jnp.sum(m2, axis=(0, 1)) + jnp.sum(
        cnt[None, :, None] * (mu_bt - mean) ** 2, axis=(0, 1))
    var = M2 / total                                         # biased, BN training mode
    inv_std = lax.rsqrt(var + _BN_EPS)
    gamma = params["gamma"].reshape(C).astype(jnp.float32)
    beta = params["beta"].reshape(C).astype(jnp.float32)
    scale = (gamma * inv_std).reshape(1, C)
    shift = (beta - mean * gamma * inv_std).reshape(1, C)    # depthwise bias cancels

    # ---------------- pass 2: grid over row tiles of (B*Tp, C) ---------------
    rows = B * Tp
    rt = _pick_row_tile(rows, C, vmem_cap)
    h2 = h.reshape(rows, C)
    mask2 = mask.reshape(rows, 1)
    ws2 = rt * C * 20 + 2 * C * C * 2
    per_row = lambda i: (i, 0)
    const_r = lambda i: (0, 0)
    out2 = pl.pallas_call(
        _bn_relu_conv2_kernel,
        grid=(pl.cdiv(rows, rt),),                 # masked partial tail block is fine
        in_specs=[
            pl.BlockSpec((rt, C), per_row),        # h (bf16)
            pl.BlockSpec((rt, 1), per_row),        # mask
            pl.BlockSpec((1, C), const_r),         # BN scale
            pl.BlockSpec((1, C), const_r),         # BN shift
            pl.BlockSpec((C, C), const_r),         # w2 (resident)
            pl.BlockSpec((1, C), const_r),         # b2
        ],
        out_specs=pl.BlockSpec((rt, C), per_row),
        out_shape=jax.ShapeDtypeStruct((rows, C), jnp.float32),
        compiler_params=pltpu.CompilerParams(
            dimension_semantics=("parallel",),
            vmem_limit_bytes=_vmem_limit(ws2, vmem_cap)),
        cost_estimate=pl.CostEstimate(
            flops=int(2 * rows * C * C + 5 * rows * C),
            transcendentals=0,
            bytes_accessed=int(rows * C * 6 + 2 * C * C + rows * 2)),
    )(h2, mask2, scale, shift, w2, b2)

    out = out2.reshape(B, Tp, C)
    if Tp != T:
        out = out[:, :T, :]
    return out


# ---------------------------------------------------------------------------
# Pure-JAX float32 reference of the torch module's forward (for validation)
# ---------------------------------------------------------------------------
def conv_module_reference(x, mask_pad, params):
    B, T, C = x.shape
    K = params["wd"].shape[0]
    pad = (K - 1) // 2
    m = jnp.transpose(mask_pad, (0, 2, 1)).astype(jnp.float32)         # (B, T, 1)
    xm = x.astype(jnp.float32) * m
    ab = jnp.einsum("btc,cd->btd", xm, params["w1"]) + params["b1"]
    g = ab[..., :C] * jax.nn.sigmoid(ab[..., C:])                      # GLU
    gp = jnp.pad(g, ((0, 0), (pad, pad), (0, 0)))
    h = sum(gp[:, k:k + T, :] * params["wd"][k] for k in range(K)) + params["bd"]
    mean = jnp.mean(h, axis=(0, 1))
    var = jnp.mean((h - mean) ** 2, axis=(0, 1))                       # biased
    hn = (h - mean) * lax.rsqrt(var + _BN_EPS) * params["gamma"] + params["beta"]
    y = jnp.maximum(hn, 0.0)
    o = jnp.einsum("btc,cd->btd", y, params["w2"]) + params["b2"]
    return o * m


def init_params(key, channels, kernel_size=15):
    """Synthetic parameters mirroring the torch module's layouts.

    torch: pointwise_conv1.weight (2C, C, 1), depthwise_conv.weight (C, 1, K),
    pointwise_conv2.weight (C, C, 1), BatchNorm1d weight/bias (C,).
    """
    C, K = channels, kernel_size
    ks = jax.random.split(key, 8)
    s = 0.1
    w1_t = s * jax.random.normal(ks[0], (2 * C, C), jnp.float32)   # (out=2C, in=C)
    b1_t = s * jax.random.normal(ks[1], (2 * C,), jnp.float32)
    wd_t = s * jax.random.normal(ks[2], (C, K), jnp.float32)       # (C, 1, K) squeezed
    bd_t = s * jax.random.normal(ks[3], (C,), jnp.float32)
    gamma = 1.0 + s * jax.random.normal(ks[4], (C,), jnp.float32)
    beta = s * jax.random.normal(ks[5], (C,), jnp.float32)
    w2_t = s * jax.random.normal(ks[6], (C, C), jnp.float32)       # (out=C, in=C)
    b2_t = s * jax.random.normal(ks[7], (C,), jnp.float32)
    return dict(
        w1=w1_t.T,                     # (C, 2C): y = x @ W.T ; cols [:C]=GLU a, [C:]=gate
        b1=b1_t.reshape(1, 2 * C),
        wd=wd_t.T,                     # (K, C)
        bd=bd_t.reshape(1, C),         # not consumed by the kernel (cancels under BN)
        gamma=gamma.reshape(1, C),
        beta=beta.reshape(1, C),
        w2=w2_t.T,                     # (C, C)
        b2=b2_t.reshape(1, C),
    )


if __name__ == "__main__":
    # T deliberately NOT a multiple of the time tile / 8: exercises the padded
    # tail (zeroed depthwise halo + masked BN stats) and the output crop.
    B, T, C, K = 2, 44, 128, 15
    key = jax.random.PRNGKey(0)
    kx, kp = jax.random.split(key)

    x = jax.random.normal(kx, (B, T, C), jnp.float32)          # (#batch, time, channels)
    lengths = jnp.array([T, 30])                               # batch 1 has padded frames
    mask_pad = jnp.arange(T)[None, None, :] < lengths[:, None, None]   # (B, 1, T) bool

    params = init_params(kp, C, K)
    out = jax.block_until_ready(conv_module_forward(x, mask_pad, params))
    assert out.shape == (B, T, C)
    assert bool(jnp.all(jnp.isfinite(out)))

    # Cross-check against the pure-JAX f32 reference of the torch forward
    # (kernel uses bf16 MXU inputs and a bf16 intermediate h, so the tolerance
    # is loose but still catches any structural error, which would be O(1)).
    ref = conv_module_reference(x, mask_pad, params)
    rel_err = jnp.max(jnp.abs(out - ref)) / (jnp.max(jnp.abs(ref)) + 1e-6)
    assert bool(rel_err < 0.08), f"relative error too large: {rel_err}"
    print("KERNEL_OK")
</pallas_src>

<mosaic_0001>
module attributes {stable_mosaic.version = 11 : i64} {
  func.func @_conv1_glu_dw_kernel(%arg0: i32, %arg1: i32, %arg2: memref<1x32x128xbf16, #tpu.memory_space<vmem>>, %arg3: memref<1x8x128xbf16, #tpu.memory_space<vmem>>, %arg4: memref<1x32x1xbf16, #tpu.memory_space<vmem>>, %arg5: memref<1x8x1xbf16, #tpu.memory_space<vmem>>, %arg6: memref<128x256xbf16, #tpu.memory_space<vmem>>, %arg7: memref<1x256xf32, #tpu.memory_space<vmem>>, %arg8: memref<15x128xf32, #tpu.memory_space<vmem>>, %arg9: memref<1x32x128xbf16, #tpu.memory_space<vmem>>, %arg10: memref<1x1x1x128xf32, #tpu.memory_space<vmem>>, %arg11: memref<1x1x1x128xf32, #tpu.memory_space<vmem>>, %arg12: memref<48x128xf32, #tpu.memory_space<vmem>>, %arg13: memref<8x128xf32, #tpu.memory_space<vmem>>) attributes {dimension_semantics = [#tpu.dimension_semantics<parallel>, #tpu.dimension_semantics<arbitrary>], iteration_bounds = array<i64: 2, 2>, scalar_prefetch = 0 : i64, scratch_operands = 2 : i64, tpu.core_type = #tpu.core_type<tc>, window_params = [{transform_indices = @transform_0, window_bounds = array<i64: 1, 32, 128>}, {transform_indices = @transform_1, window_bounds = array<i64: 1, 8, 128>}, {transform_indices = @transform_2, window_bounds = array<i64: 1, 32, 1>}, {transform_indices = @transform_3, window_bounds = array<i64: 1, 8, 1>}, {pipeline_mode = #tpu.pipeline_mode<synchronous>, transform_indices = @transform_4, window_bounds = array<i64: 128, 256>}, {pipeline_mode = #tpu.pipeline_mode<synchronous>, transform_indices = @transform_5, window_bounds = array<i64: 1, 256>}, {pipeline_mode = #tpu.pipeline_mode<synchronous>, transform_indices = @transform_6, window_bounds = array<i64: 15, 128>}, {transform_indices = @transform_7, window_bounds = array<i64: 1, 32, 128>}, {transform_indices = @transform_8, window_bounds = array<i64: 1, 1, 1, 128>}, {transform_indices = @transform_9, window_bounds = array<i64: 1, 1, 1, 128>}]} {
    %c0_i32 = arith.constant 0 : i32
    %0 = arith.cmpi eq, %arg1, %c0_i32 : i32
    %1 = arith.extui %0 : i1 to i32
    %c0_i32_0 = arith.constant 0 : i32
    %2 = arith.cmpi ne, %1, %c0_i32_0 : i32
    scf.if %2 {
      %cst_66 = arith.constant 0.000000e+00 : f32
      %168 = vector.broadcast %cst_66 : f32 to vector<8x128xf32>
      %c0_67 = arith.constant 0 : index
      %c0_68 = arith.constant 0 : index
      %169 = vector.load %arg13[%c0_67, %c0_68] : memref<8x128xf32, #tpu.memory_space<vmem>>, vector<8x128xf32>
      tpu.vector_store %arg13[%c0_67, %c0_68], %168 {strides = array<i32>} : memref<8x128xf32, #tpu.memory_space<vmem>>, vector<8x128xf32>,
    } else {
    }
    %c32_i32 = arith.constant 32 : i32
    %3 = arith.muli %arg1, %c32_i32 : i32
    %4 = tpu.iota {dimensions = array<i32: 0>} : vector<32x1xi32>
    %5 = vector.broadcast %3 : i32 to vector<32x1xi32>
    %6 = arith.addi %5, %4 : vector<32x1xi32>
    %c44_i32 = arith.constant 44 : i32
    %7 = vector.broadcast %c44_i32 : i32 to vector<32x1xi32>
    %8 = arith.cmpi slt, %6, %7 : vector<32x1xi32>
    %9 = arith.extui %8 : vector<32x1xi1> to vector<32x1xi32>
    %10 = arith.sitofp %9 : vector<32x1xi32> to vector<32x1xf32>
    %c0 = arith.constant 0 : index
    %c0_1 = arith.constant 0 : index
    %c0_2 = arith.constant 0 : index
    %11 = vector.load %arg2[%c0, %c0_1, %c0_2] : memref<1x32x128xbf16, #tpu.memory_space<vmem>>, vector<1x32x128xbf16>
    %12 = vector.shape_cast %11 : vector<1x32x128xbf16> to vector<32x128xbf16>
    %c0_3 = arith.constant 0 : index
    %c0_4 = arith.constant 0 : index
    %c0_5 = arith.constant 0 : index
    %13 = vector.load %arg4[%c0_3, %c0_4, %c0_5] : memref<1x32x1xbf16, #tpu.memory_space<vmem>>, vector<1x32x1xbf16>
    %14 = vector.shape_cast %13 : vector<1x32x1xbf16> to vector<32x1xbf16>
    %15 = vector.broadcast %14 : vector<32x1xbf16> to vector<32x128xbf16>
    %16 = arith.mulf %12, %15 : vector<32x128xbf16>
    %c0_6 = arith.constant 0 : index
    %c0_7 = arith.constant 0 : index
    %17 = vector.load %arg6[%c0_6, %c0_7] : memref<128x256xbf16, #tpu.memory_space<vmem>>, vector<128x256xbf16>
    %cst = arith.constant dense<0.000000e+00> : vector<32x256xf32>
    %18 = tpu.matmul %16, %17, %cst {dimension_numbers = #tpu.dot_dimension_numbers<[1], [0], [0], [1], [0, 0, 1, 1], [], []>} : vector<32x128xbf16>, vector<128x256xbf16>, vector<32x256xf32> -> vector<32x256xf32>
    %c0_8 = arith.constant 0 : index
    %c0_9 = arith.constant 0 : index
    %19 = vector.load %arg7[%c0_8, %c0_9] : memref<1x256xf32, #tpu.memory_space<vmem>>, vector<1x256xf32>
    %20 = vector.broadcast %19 : vector<1x256xf32> to vector<32x256xf32>
    %21 = arith.addf %18, %20 : vector<32x256xf32>
    %22 = vector.extract_strided_slice %21 {offsets = [0, 0], sizes = [32, 128], strides = [1, 1]} : vector<32x256xf32> to vector<32x128xf32>
    %23 = vector.extract_strided_slice %21 {offsets = [0, 128], sizes = [32, 128], strides = [1, 1]} : vector<32x256xf32> to vector<32x128xf32>
    %24 = arith.negf %23 : vector<32x128xf32>
    %25 = math.exp %24 : vector<32x128xf32>
    %cst_10 = arith.constant 1.000000e+00 : f32
    %26 = vector.broadcast %cst_10 : f32 to vector<32x128xf32>
    %27 = arith.addf %26, %25 : vector<32x128xf32>
    %28 = arith.divf %26, %27 : vector<32x128xf32>
    %29 = arith.mulf %22, %28 : vector<32x128xf32>
    %30 = vector.broadcast %10 : vector<32x1xf32> to vector<32x128xf32>
    %31 = arith.mulf %29, %30 : vector<32x128xf32>
    %c0_11 = arith.constant 0 : index
    %c0_12 = arith.constant 0 : index
    %c0_13 = arith.constant 0 : index
    %32 = vector.load %arg3[%c0_11, %c0_12, %c0_13] : memref<1x8x128xbf16, #tpu.memory_space<vmem>>, vector<1x8x128xbf16>
    %33 = vector.shape_cast %32 : vector<1x8x128xbf16> to vector<8x128xbf16>
    %c0_14 = arith.constant 0 : index
    %c0_15 = arith.constant 0 : index
    %c0_16 = arith.constant 0 : index
    %34 = vector.load %arg5[%c0_14, %c0_15, %c0_16] : memref<1x8x1xbf16, #tpu.memory_space<vmem>>, vector<1x8x1xbf16>
    %35 = vector.shape_cast %34 : vector<1x8x1xbf16> to vector<8x1xbf16>
    %36 = vector.broadcast %35 : vector<8x1xbf16> to vector<8x128xbf16>
    %37 = arith.mulf %33, %36 : vector<8x128xbf16>
    %c0_17 = arith.constant 0 : index
    %c0_18 = arith.constant 0 : index
    %38 = vector.load %arg6[%c0_17, %c0_18] : memref<128x256xbf16, #tpu.memory_space<vmem>>, vector<128x256xbf16>
    %cst_19 = arith.constant dense<0.000000e+00> : vector<8x256xf32>
    %39 = tpu.matmul %37, %38, %cst_19 {dimension_numbers = #tpu.dot_dimension_numbers<[1], [0], [0], [1], [0, 0, 1, 1], [], []>} : vector<8x128xbf16>, vector<128x256xbf16>, vector<8x256xf32> -> vector<8x256xf32>
    %c0_20 = arith.constant 0 : index
    %c0_21 = arith.constant 0 : index
    %40 = vector.load %arg7[%c0_20, %c0_21] : memref<1x256xf32, #tpu.memory_space<vmem>>, vector<1x256xf32>
    %41 = vector.broadcast %40 : vector<1x256xf32> to vector<8x256xf32>
    %42 = arith.addf %39, %41 : vector<8x256xf32>
    %43 = vector.extract_strided_slice %42 {offsets = [0, 0], sizes = [8, 128], strides = [1, 1]} : vector<8x256xf32> to vector<8x128xf32>
    %44 = vector.extract_strided_slice %42 {offsets = [0, 128], sizes = [8, 128], strides = [1, 1]} : vector<8x256xf32> to vector<8x128xf32>
    %45 = arith.negf %44 : vector<8x128xf32>
    %46 = math.exp %45 : vector<8x128xf32>
    %cst_22 = arith.constant 1.000000e+00 : f32
    %47 = vector.broadcast %cst_22 : f32 to vector<8x128xf32>
    %48 = arith.addf %47, %46 : vector<8x128xf32>
    %49 = arith.divf %47, %48 : vector<8x128xf32>
    %50 = arith.mulf %43, %49 : vector<8x128xf32>
    %c1_i32 = arith.constant 1 : i32
    %51 = arith.addi %arg1, %c1_i32 : i32
    %c32_i32_23 = arith.constant 32 : i32
    %52 = arith.muli %51, %c32_i32_23 : i32
    %53 = tpu.iota {dimensions = array<i32: 0>} : vector<8x1xi32>
    %54 = vector.broadcast %52 : i32 to vector<8x1xi32>
    %55 = arith.addi %54, %53 : vector<8x1xi32>
    %c44_i32_24 = arith.constant 44 : i32
    %56 = vector.broadcast %c44_i32_24 : i32 to vector<8x1xi32>
    %57 = arith.cmpi slt, %55, %56 : vector<8x1xi32>
    %58 = arith.extui %57 : vector<8x1xi1> to vector<8x1xi32>
    %59 = arith.sitofp %58 : vector<8x1xi32> to vector<8x1xf32>
    %60 = vector.broadcast %59 : vector<8x1xf32> to vector<8x128xf32>
    %61 = arith.mulf %50, %60 : vector<8x128xf32>
    %c0_25 = arith.constant 0 : index
    %c0_26 = arith.constant 0 : index
    %62 = vector.load %arg13[%c0_25, %c0_26] : memref<8x128xf32, #tpu.memory_space<vmem>>, vector<8x128xf32>
    %c0_27 = arith.constant 0 : index
    %c0_28 = arith.constant 0 : index
    %63 = vector.load %arg12[%c0_27, %c0_28] : memref<48x128xf32, #tpu.memory_space<vmem>>, vector<8x128xf32>
    tpu.vector_store %arg12[%c0_27, %c0_28], %62 {strides = array<i32>} : memref<48x128xf32, #tpu.memory_space<vmem>>, vector<8x128xf32>,
    %c8 = arith.constant 8 : index
    %c0_29 = arith.constant 0 : index
    %64 = vector.load %arg12[%c8, %c0_29] : memref<48x128xf32, #tpu.memory_space<vmem>>, vector<32x128xf32>
    tpu.vector_store %arg12[%c8, %c0_29], %31 {strides = array<i32>} : memref<48x128xf32, #tpu.memory_space<vmem>>, vector<32x128xf32>,
    %c40 = arith.constant 40 : index
    %c0_30 = arith.constant 0 : index
    %65 = vector.load %arg12[%c40, %c0_30] : memref<48x128xf32, #tpu.memory_space<vmem>>, vector<8x128xf32>
    tpu.vector_store %arg12[%c40, %c0_30], %61 {strides = array<i32>} : memref<48x128xf32, #tpu.memory_space<vmem>>, vector<8x128xf32>,
    %66 = vector.extract_strided_slice %31 {offsets = [24, 0], sizes = [8, 128], strides = [1, 1]} : vector<32x128xf32> to vector<8x128xf32>
    %c0_31 = arith.constant 0 : index
    %c0_32 = arith.constant 0 : index
    %67 = vector.load %arg13[%c0_31, %c0_32] : memref<8x128xf32, #tpu.memory_space<vmem>>, vector<8x128xf32>
    tpu.vector_store %arg13[%c0_31, %c0_32], %66 {strides = array<i32>} : memref<8x128xf32, #tpu.memory_space<vmem>>, vector<8x128xf32>,
    %c0_33 = arith.constant 0 : index
    %c0_34 = arith.constant 0 : index
    %68 = vector.load %arg8[%c0_33, %c0_34] : memref<15x128xf32, #tpu.memory_space<vmem>>, vector<15x128xf32>
    %c1 = arith.constant 1 : index
    %c0_35 = arith.constant 0 : index
    %69 = vector.load %arg12[%c1, %c0_35] : memref<48x128xf32, #tpu.memory_space<vmem>>, vector<32x128xf32>
    %70 = vector.extract_strided_slice %68 {offsets = [0, 0], sizes = [1, 128], strides = [1, 1]} : vector<15x128xf32> to vector<1x128xf32>
    %71 = vector.broadcast %70 : vector<1x128xf32> to vector<32x128xf32>
    %72 = arith.mulf %69, %71 : vector<32x128xf32>
    %c2 = arith.constant 2 : index
    %c0_36 = arith.constant 0 : index
    %73 = vector.load %arg12[%c2, %c0_36] : memref<48x128xf32, #tpu.memory_space<vmem>>, vector<32x128xf32>
    %74 = vector.extract_strided_slice %68 {offsets = [1, 0], sizes = [1, 128], strides = [1, 1]} : vector<15x128xf32> to vector<1x128xf32>
    %75 = vector.broadcast %74 : vector<1x128xf32> to vector<32x128xf32>
    %76 = arith.mulf %73, %75 : vector<32x128xf32>
    %c3 = arith.constant 3 : index
    %c0_37 = arith.constant 0 : index
    %77 = vector.load %arg12[%c3, %c0_37] : memref<48x128xf32, #tpu.memory_space<vmem>>, vector<32x128xf32>
    %78 = vector.extract_strided_slice %68 {offsets = [2, 0], sizes = [1, 128], strides = [1, 1]} : vector<15x128xf32> to vector<1x128xf32>
    %79 = vector.broadcast %78 : vector<1x128xf32> to vector<32x128xf32>
    %80 = arith.mulf %77, %79 : vector<32x128xf32>
    %81 = arith.addf %72, %80 : vector<32x128xf32>
    %c4 = arith.constant 4 : index
    %c0_38 = arith.constant 0 : index
    %82 = vector.load %arg12[%c4, %c0_38] : memref<48x128xf32, #tpu.memory_space<vmem>>, vector<32x128xf32>
    %83 = vector.extract_strided_slice %68 {offsets = [3, 0], sizes = [1, 128], strides = [1, 1]} : vector<15x128xf32> to vector<1x128xf32>
    %84 = vector.broadcast %83 : vector<1x128xf32> to vector<32x128xf32>
    %85 = arith.mulf %82, %84 : vector<32x128xf32>
    %86 = arith.addf %76, %85 : vector<32x128xf32>
    %c5 = arith.constant 5 : index
    %c0_39 = arith.constant 0 : index
    %87 = vector.load %arg12[%c5, %c0_39] : memref<48x128xf32, #tpu.memory_space<vmem>>, vector<32x128xf32>
    %88 = vector.extract_strided_slice %68 {offsets = [4, 0], sizes = [1, 128], strides = [1, 1]} : vector<15x128xf32> to vector<1x128xf32>
    %89 = vector.broadcast %88 : vector<1x128xf32> to vector<32x128xf32>
    %90 = arith.mulf %87, %89 : vector<32x128xf32>
    %91 = arith.addf %81, %90 : vector<32x128xf32>
    %c6 = arith.constant 6 : index
    %c0_40 = arith.constant 0 : index
    %92 = vector.load %arg12[%c6, %c0_40] : memref<48x128xf32, #tpu.memory_space<vmem>>, vector<32x128xf32>
    %93 = vector.extract_strided_slice %68 {offsets = [5, 0], sizes = [1, 128], strides = [1, 1]} : vector<15x128xf32> to vector<1x128xf32>
    %94 = vector.broadcast %93 : vector<1x128xf32> to vector<32x128xf32>
    %95 = arith.mulf %92, %94 : vector<32x128xf32>
    %96 = arith.addf %86, %95 : vector<32x128xf32>
    %c7 = arith.constant 7 : index
    %c0_41 = arith.constant 0 : index
    %97 = vector.load %arg12[%c7, %c0_41] : memref<48x128xf32, #tpu.memory_space<vmem>>, vector<32x128xf32>
    %98 = vector.extract_strided_slice %68 {offsets = [6, 0], sizes = [1, 128], strides = [1, 1]} : vector<15x128xf32> to vector<1x128xf32>
    %99 = vector.broadcast %98 : vector<1x128xf32> to vector<32x128xf32>
    %100 = arith.mulf %97, %99 : vector<32x128xf32>
    %101 = arith.addf %91, %100 : vector<32x128xf32>
    %c8_42 = arith.constant 8 : index
    %c0_43 = arith.constant 0 : index
    %102 = vector.load %arg12[%c8_42, %c0_43] : memref<48x128xf32, #tpu.memory_space<vmem>>, vector<32x128xf32>
    %103 = vector.extract_strided_slice %68 {offsets = [7, 0], sizes = [1, 128], strides = [1, 1]} : vector<15x128xf32> to vector<1x128xf32>
    %104 = vector.broadcast %103 : vector<1x128xf32> to vector<32x128xf32>
    %105 = arith.mulf %102, %104 : vector<32x128xf32>
    %106 = arith.addf %96, %105 : vector<32x128xf32>
    %c9 = arith.constant 9 : index
    %c0_44 = arith.constant 0 : index
    %107 = vector.load %arg12[%c9, %c0_44] : memref<48x128xf32, #tpu.memory_space<vmem>>, vector<32x128xf32>
    %108 = vector.extract_strided_slice %68 {offsets = [8, 0], sizes = [1, 128], strides = [1, 1]} : vector<15x128xf32> to vector<1x128xf32>
    %109 = vector.broadcast %108 : vector<1x128xf32> to vector<32x128xf32>
    %110 = arith.mulf %107, %109 : vector<32x128xf32>
    %111 = arith.addf %101, %110 : vector<32x128xf32>
    %c10 = arith.constant 10 : index
    %c0_45 = arith.constant 0 : index
    %112 = vector.load %arg12[%c10, %c0_45] : memref<48x128xf32, #tpu.memory_space<vmem>>, vector<32x128xf32>
    %113 = vector.extract_strided_slice %68 {offsets = [9, 0], sizes = [1, 128], strides = [1, 1]} : vector<15x128xf32> to vector<1x128xf32>
    %114 = vector.broadcast %113 : vector<1x128xf32> to vector<32x128xf32>
    %115 = arith.mulf %112, %114 : vector<32x128xf32>
    %116 = arith.addf %106, %115 : vector<32x128xf32>
    %c11 = arith.constant 11 : index
    %c0_46 = arith.constant 0 : index
    %117 = vector.load %arg12[%c11, %c0_46] : memref<48x128xf32, #tpu.memory_space<vmem>>, vector<32x128xf32>
    %118 = vector.extract_strided_slice %68 {offsets = [10, 0], sizes = [1, 128], strides = [1, 1]} : vector<15x128xf32> to vector<1x128xf32>
    %119 = vector.broadcast %118 : vector<1x128xf32> to vector<32x128xf32>
    %120 = arith.mulf %117, %119 : vector<32x128xf32>
    %121 = arith.addf %111, %120 : vector<32x128xf32>
    %c12 = arith.constant 12 : index
    %c0_47 = arith.constant 0 : index
    %122 = vector.load %arg12[%c12, %c0_47] : memref<48x128xf32, #tpu.memory_space<vmem>>, vector<32x128xf32>
    %123 = vector.extract_strided_slice %68 {offsets = [11, 0], sizes = [1, 128], strides = [1, 1]} : vector<15x128xf32> to vector<1x128xf32>
    %124 = vector.broadcast %123 : vector<1x128xf32> to vector<32x128xf32>
    %125 = arith.mulf %122, %124 : vector<32x128xf32>
    %126 = arith.addf %116, %125 : vector<32x128xf32>
    %c13 = arith.constant 13 : index
    %c0_48 = arith.constant 0 : index
    %127 = vector.load %arg12[%c13, %c0_48] : memref<48x128xf32, #tpu.memory_space<vmem>>, vector<32x128xf32>
    %128 = vector.extract_strided_slice %68 {offsets = [12, 0], sizes = [1, 128], strides = [1, 1]} : vector<15x128xf32> to vector<1x128xf32>
    %129 = vector.broadcast %128 : vector<1x128xf32> to vector<32x128xf32>
    %130 = arith.mulf %127, %129 : vector<32x128xf32>
    %131 = arith.addf %121, %130 : vector<32x128xf32>
    %c14 = arith.constant 14 : index
    %c0_49 = arith.constant 0 : index
    %132 = vector.load %arg12[%c14, %c0_49] : memref<48x128xf32, #tpu.memory_space<vmem>>, vector<32x128xf32>
    %133 = vector.extract_strided_slice %68 {offsets = [13, 0], sizes = [1, 128], strides = [1, 1]} : vector<15x128xf32> to vector<1x128xf32>
    %134 = vector.broadcast %133 : vector<1x128xf32> to vector<32x128xf32>
    %135 = arith.mulf %132, %134 : vector<32x128xf32>
    %136 = arith.addf %126, %135 : vector<32x128xf32>
    %c15 = arith.constant 15 : index
    %c0_50 = arith.constant 0 : index
    %137 = vector.load %arg12[%c15, %c0_50] : memref<48x128xf32, #tpu.memory_space<vmem>>, vector<32x128xf32>
    %138 = vector.extract_strided_slice %68 {offsets = [14, 0], sizes = [1, 128], strides = [1, 1]} : vector<15x128xf32> to vector<1x128xf32>
    %139 = vector.broadcast %138 : vector<1x128xf32> to vector<32x128xf32>
    %140 = arith.mulf %137, %139 : vector<32x128xf32>
    %141 = arith.addf %131, %140 : vector<32x128xf32>
    %142 = arith.addf %141, %136 : vector<32x128xf32>
    %143 = vector.shape_cast %142 : vector<32x128xf32> to vector<1x32x128xf32>
    %144 = arith.truncf %143 : vector<1x32x128xf32> to vector<1x32x128xbf16>
    %c0_51 = arith.constant 0 : index
    %c0_52 = arith.constant 0 : index
    %c0_53 = arith.constant 0 : index
    %145 = vector.load %arg9[%c0_51, %c0_52, %c0_53] : memref<1x32x128xbf16, #tpu.memory_space<vmem>>, vector<1x32x128xbf16>
    tpu.vector_store %arg9[%c0_51, %c0_52, %c0_53], %144 {strides = array<i32>} : memref<1x32x128xbf16, #tpu.memory_space<vmem>>, vector<1x32x128xbf16>,
    %146 = vector.broadcast %10 : vector<32x1xf32> to vector<32x128xf32>
    %147 = arith.mulf %142, %146 : vector<32x128xf32>
    %cst_54 = arith.constant dense<0.000000e+00> : vector<128xf32>
    %148 = vector.multi_reduction <add>, %147, %cst_54 [0] : vector<32x128xf32> to vector<128xf32>
    %149 = vector.shape_cast %148 : vector<128xf32> to vector<1x128xf32>
    %150 = vector.shape_cast %10 : vector<32x1xf32> to vector<1x32x1xf32>
    %cst_55 = arith.constant dense<0.000000e+00> : vector<1xf32>
    %151 = vector.multi_reduction <add>, %150, %cst_55 [1, 2] : vector<1x32x1xf32> to vector<1xf32>
    %152 = vector.shape_cast %151 : vector<1xf32> to vector<1x1x1xf32>
    %153 = vector.extract %152[0, 0, 0] : f32 from vector<1x1x1xf32>
    %cst_56 = arith.constant 1.000000e+00 : f32
    %154 = arith.maximumf %153, %cst_56 : f32
    %155 = vector.broadcast %154 : f32 to vector<1x128xf32>
    %156 = arith.divf %149, %155 : vector<1x128xf32>
    %157 = vector.broadcast %156 : vector<1x128xf32> to vector<32x128xf32>
    %158 = arith.subf %142, %157 : vector<32x128xf32>
    %159 = vector.broadcast %10 : vector<32x1xf32> to vector<32x128xf32>
    %160 = arith.mulf %158, %159 : vector<32x128xf32>
    %161 = arith.mulf %160, %160 : vector<32x128xf32>
    %cst_57 = arith.constant dense<0.000000e+00> : vector<128xf32>
    %162 = vector.multi_reduction <add>, %161, %cst_57 [0] : vector<32x128xf32> to vector<128xf32>
    %163 = vector.shape_cast %162 : vector<128xf32> to vector<1x128xf32>
    %164 = vector.shape_cast %149 : vector<1x128xf32> to vector<1x1x1x128xf32>
    %c0_58 = arith.constant 0 : index
    %c0_59 = arith.constant 0 : index
    %c0_60 = arith.constant 0 : index
    %c0_61 = arith.constant 0 : index
    %165 = vector.load %arg10[%c0_58, %c0_59, %c0_60, %c0_61] : memref<1x1x1x128xf32, #tpu.memory_space<vmem>>, vector<1x1x1x128xf32>
    tpu.vector_store %arg10[%c0_58, %c0_59, %c0_60, %c0_61], %164 {strides = array<i32>} : memref<1x1x1x128xf32, #tpu.memory_space<vmem>>, vector<1x1x1x128xf32>,
    %166 = vector.shape_cast %163 : vector<1x128xf32> to vector<1x1x1x128xf32>
    %c0_62 = arith.constant 0 : index
    %c0_63 = arith.constant 0 : index
    %c0_64 = arith.constant 0 : index
    %c0_65 = arith.constant 0 : index
    %167 = vector.load %arg11[%c0_62, %c0_63, %c0_64, %c0_65] : memref<1x1x1x128xf32, #tpu.memory_space<vmem>>, vector<1x1x1x128xf32>
    tpu.vector_store %arg11[%c0_62, %c0_63, %c0_64, %c0_65], %166 {strides = array<i32>} : memref<1x1x1x128xf32, #tpu.memory_space<vmem>>, vector<1x1x1x128xf32>,
    return
  }
  func.func @transform_0(%arg0: i32, %arg1: i32) -> (i32, i32, i32) {
    %c0_i32 = arith.constant 0 : i32
    %c0_i32_0 = arith.constant 0 : i32
    return %arg0, %arg1, %c0_i32 : i32, i32, i32
  }
  func.func @transform_1(%arg0: i32, %arg1: i32) -> (i32, i32, i32) {
    %c1_i32 = arith.constant 1 : i32
    %0 = arith.addi %arg1, %c1_i32 : i32
    %c4_i32 = arith.constant 4 : i32
    %1 = arith.muli %0, %c4_i32 : i32
    %c7_i32 = arith.constant 7 : i32
    %2 = arith.minsi %1, %c7_i32 : i32
    %c0_i32 = arith.constant 0 : i32
    %c0_i32_0 = arith.constant 0 : i32
    return %arg0, %2, %c0_i32 : i32, i32, i32
  }
  func.func @transform_2(%arg0: i32, %arg1: i32) -> (i32, i32, i32) {
    %c0_i32 = arith.constant 0 : i32
    %c0_i32_0 = arith.constant 0 : i32
    return %arg0, %arg1, %c0_i32 : i32, i32, i32
  }
  func.func @transform_3(%arg0: i32, %arg1: i32) -> (i32, i32, i32) {
    %c1_i32 = arith.constant 1 : i32
    %0 = arith.addi %arg1, %c1_i32 : i32
    %c4_i32 = arith.constant 4 : i32
    %1 = arith.muli %0, %c4_i32 : i32
    %c7_i32 = arith.constant 7 : i32
    %2 = arith.minsi %1, %c7_i32 : i32
    %c0_i32 = arith.constant 0 : i32
    %c0_i32_0 = arith.constant 0 : i32
    return %arg0, %2, %c0_i32 : i32, i32, i32
  }
  func.func @transform_4(%arg0: i32, %arg1: i32) -> (i32, i32) {
    %c0_i32 = arith.constant 0 : i32
    %c0_i32_0 = arith.constant 0 : i32
    %c0_i32_1 = arith.constant 0 : i32
    return %c0_i32, %c0_i32_0 : i32, i32
  }
  func.func @transform_5(%arg0: i32, %arg1: i32) -> (i32, i32) {
    %c0_i32 = arith.constant 0 : i32
    %c0_i32_0 = arith.constant 0 : i32
    %c0_i32_1 = arith.constant 0 : i32
    return %c0_i32, %c0_i32_0 : i32, i32
  }
  func.func @transform_6(%arg0: i32, %arg1: i32) -> (i32, i32) {
    %c0_i32 = arith.constant 0 : i32
    %c0_i32_0 = arith.constant 0 : i32
    %c0_i32_1 = arith.constant 0 : i32
    return %c0_i32, %c0_i32_0 : i32, i32
  }
  func.func @transform_7(%arg0: i32, %arg1: i32) -> (i32, i32, i32) {
    %c0_i32 = arith.constant 0 : i32
    %c0_i32_0 = arith.constant 0 : i32
    return %arg0, %arg1, %c0_i32 : i32, i32, i32
  }
  func.func @transform_8(%arg0: i32, %arg1: i32) -> (i32, i32, i32, i32) {
    %c0_i32 = arith.constant 0 : i32
    %c0_i32_0 = arith.constant 0 : i32
    %c0_i32_1 = arith.constant 0 : i32
    return %arg0, %arg1, %c0_i32, %c0_i32_0 : i32, i32, i32, i32
  }
  func.func @transform_9(%arg0: i32, %arg1: i32) -> (i32, i32, i32, i32) {
    %c0_i32 = arith.constant 0 : i32
    %c0_i32_0 = arith.constant 0 : i32
    %c0_i32_1 = arith.constant 0 : i32
    return %arg0, %arg1, %c0_i32, %c0_i32_0 : i32, i32, i32, i32
  }
}

module attributes {stable_mosaic.version = 11 : i64} {
  func.func @_bn_relu_conv2_kernel(%arg0: i32, %arg1: memref<128x128xbf16, #tpu.memory_space<vmem>>, %arg2: memref<128x1xbf16, #tpu.memory_space<vmem>>, %arg3: memref<1x128xf32, #tpu.memory_space<vmem>>, %arg4: memref<1x128xf32, #tpu.memory_space<vmem>>, %arg5: memref<128x128xbf16, #tpu.memory_space<vmem>>, %arg6: memref<1x128xf32, #tpu.memory_space<vmem>>, %arg7: memref<128x128xf32, #tpu.memory_space<vmem>>) attributes {dimension_semantics = [#tpu.dimension_semantics<parallel>], iteration_bounds = array<i64: 1>, scalar_prefetch = 0 : i64, scratch_operands = 0 : i64, tpu.core_type = #tpu.core_type<tc>, window_params = [{transform_indices = @transform_0, window_bounds = array<i64: 128, 128>}, {transform_indices = @transform_1, window_bounds = array<i64: 128, 1>}, {pipeline_mode = #tpu.pipeline_mode<synchronous>, transform_indices = @transform_2, window_bounds = array<i64: 1, 128>}, {pipeline_mode = #tpu.pipeline_mode<synchronous>, transform_indices = @transform_3, window_bounds = array<i64: 1, 128>}, {pipeline_mode = #tpu.pipeline_mode<synchronous>, transform_indices = @transform_4, window_bounds = array<i64: 128, 128>}, {pipeline_mode = #tpu.pipeline_mode<synchronous>, transform_indices = @transform_5, window_bounds = array<i64: 1, 128>}, {transform_indices = @transform_6, window_bounds = array<i64: 128, 128>}]} {
    %c0 = arith.constant 0 : index
    %c0_0 = arith.constant 0 : index
    %0 = vector.load %arg1[%c0, %c0_0] : memref<128x128xbf16, #tpu.memory_space<vmem>>, vector<128x128xbf16>
    %1 = arith.extf %0 : vector<128x128xbf16> to vector<128x128xf32>
    %c0_1 = arith.constant 0 : index
    %c0_2 = arith.constant 0 : index
    %2 = vector.load %arg3[%c0_1, %c0_2] : memref<1x128xf32, #tpu.memory_space<vmem>>, vector<1x128xf32>
    %3 = vector.broadcast %2 : vector<1x128xf32> to vector<128x128xf32>
    %4 = arith.mulf %1, %3 : vector<128x128xf32>
    %c0_3 = arith.constant 0 : index
    %c0_4 = arith.constant 0 : index
    %5 = vector.load %arg4[%c0_3, %c0_4] : memref<1x128xf32, #tpu.memory_space<vmem>>, vector<1x128xf32>
    %6 = vector.broadcast %5 : vector<1x128xf32> to vector<128x128xf32>
    %7 = arith.addf %4, %6 : vector<128x128xf32>
    %cst = arith.constant 0.000000e+00 : f32
    %8 = vector.broadcast %cst : f32 to vector<128x128xf32>
    %9 = arith.maximumf %7, %8 : vector<128x128xf32>
    %c0_5 = arith.constant 0 : index
    %c0_6 = arith.constant 0 : index
    %10 = vector.load %arg5[%c0_5, %c0_6] : memref<128x128xbf16, #tpu.memory_space<vmem>>, vector<128x128xbf16>
    %11 = arith.truncf %9 : vector<128x128xf32> to vector<128x128xbf16>
    %cst_7 = arith.constant dense<0.000000e+00> : vector<128x128xf32>
    %12 = tpu.matmul %11, %10, %cst_7 {dimension_numbers = #tpu.dot_dimension_numbers<[1], [0], [0], [1], [0, 0, 1, 1], [], []>} : vector<128x128xbf16>, vector<128x128xbf16>, vector<128x128xf32> -> vector<128x128xf32>
    %c0_8 = arith.constant 0 : index
    %c0_9 = arith.constant 0 : index
    %13 = vector.load %arg6[%c0_8, %c0_9] : memref<1x128xf32, #tpu.memory_space<vmem>>, vector<1x128xf32>
    %14 = vector.broadcast %13 : vector<1x128xf32> to vector<128x128xf32>
    %15 = arith.addf %12, %14 : vector<128x128xf32>
    %c0_10 = arith.constant 0 : index
    %c0_11 = arith.constant 0 : index
    %16 = vector.load %arg2[%c0_10, %c0_11] : memref<128x1xbf16, #tpu.memory_space<vmem>>, vector<128x1xbf16>
    %17 = arith.extf %16 : vector<128x1xbf16> to vector<128x1xf32>
    %18 = vector.broadcast %17 : vector<128x1xf32> to vector<128x128xf32>
    %19 = arith.mulf %15, %18 : vector<128x128xf32>
    %c0_12 = arith.constant 0 : index
    %c0_13 = arith.constant 0 : index
    %20 = vector.load %arg7[%c0_12, %c0_13] : memref<128x128xf32, #tpu.memory_space<vmem>>, vector<128x128xf32>
    tpu.vector_store %arg7[%c0_12, %c0_13], %19 {strides = array<i32>} : memref<128x128xf32, #tpu.memory_space<vmem>>, vector<128x128xf32>,
    return
  }
  func.func @transform_0(%arg0: i32) -> (i32, i32) {
    %c0_i32 = arith.constant 0 : i32
    %c0_i32_0 = arith.constant 0 : i32
    return %arg0, %c0_i32 : i32, i32
  }
  func.func @transform_1(%arg0: i32) -> (i32, i32) {
    %c0_i32 = arith.constant 0 : i32
    %c0_i32_0 = arith.constant 0 : i32
    return %arg0, %c0_i32 : i32, i32
  }
  func.func @transform_2(%arg0: i32) -> (i32, i32) {
    %c0_i32 = arith.constant 0 : i32
    %c0_i32_0 = arith.constant 0 : i32
    %c0_i32_1 = arith.constant 0 : i32
    return %c0_i32, %c0_i32_0 : i32, i32
  }
  func.func @transform_3(%arg0: i32) -> (i32, i32) {
    %c0_i32 = arith.constant 0 : i32
    %c0_i32_0 = arith.constant 0 : i32
    %c0_i32_1 = arith.constant 0 : i32
    return %c0_i32, %c0_i32_0 : i32, i32
  }
  func.func @transform_4(%arg0: i32) -> (i32, i32) {
    %c0_i32 = arith.constant 0 : i32
    %c0_i32_0 = arith.constant 0 : i32
    %c0_i32_1 = arith.constant 0 : i32
    return %c0_i32, %c0_i32_0 : i32, i32
  }
  func.func @transform_5(%arg0: i32) -> (i32, i32) {
    %c0_i32 = arith.constant 0 : i32
    %c0_i32_0 = arith.constant 0 : i32
    %c0_i32_1 = arith.constant 0 : i32
    return %c0_i32, %c0_i32_0 : i32, i32
  }
  func.func @transform_6(%arg0: i32) -> (i32, i32) {
    %c0_i32 = arith.constant 0 : i32
    %c0_i32_0 = arith.constant 0 : i32
    return %arg0, %c0_i32 : i32, i32
  }
}

</mosaic_0001>

<llo_original>
// kernel: conv_module_forward.3
$region0: #{conv_module_forward.3}
  #allocation0 [shape = 'u32[]', space=smem, size = 0x4, offset = 0x4, fixed_abs, tag = 'smem constant byte address 0x4 - core index']
  #allocation1 [shape = 'u32[144,128]{1,0:T(1,128)}', space=vmem, size = 0x12000, scoped, tag = 'internal scratch']
  %s0 = inlined_call_operand.vmem [shape: bf16[128,128], index: 0, kind: input, shape index: {}]
  %s1 = inlined_call_operand.vmem [shape: bf16[128,1], index: 1, kind: input, shape index: {}]
  %s2 = inlined_call_operand.vmem [shape: f32[1,128], index: 2, kind: input, shape index: {}]
  %s3 = inlined_call_operand.vmem [shape: f32[1,128], index: 3, kind: input, shape index: {}]
  %s4 = inlined_call_operand.vmem [shape: bf16[128,128], index: 4, kind: input, shape index: {}]
  %s5 = inlined_call_operand.vmem [shape: f32[1,128], index: 5, kind: input, shape index: {}]
  %s6 = inlined_call_operand.vmem [shape: f32[128,128], index: 6, kind: output, shape index: {}]
  %s7 = sld [smem:[#allocation0]]
  $region34: #{conv_module_forward.3} parent=0
    _
  %s9 = ssub.s32 1, %s7
  %s10 = scalar_select 0, %s9, %s7
  // Predicated region
  $region2: #{conv_module_forward.3} parent=0 // pred_check
    _
  $region3: #{conv_module_forward.3} parent=0 // pred_check_branch
    %12 = sbr.rel (0) target = $region5
  $region4: #{conv_module_forward.3} parent=0 // pred_region
    _
  $region5: #{conv_module_forward.3} parent=0 // pred_fallthru
    _
  // Predicated region
  $region6: #{conv_module_forward.3} parent=0 // pred_check
    _
  $region7: #{conv_module_forward.3} parent=0 // pred_check_branch
    %14 = sbr.rel (0) target = $region9
  $region8: #{conv_module_forward.3} parent=0 // pred_region
    _
  $region9: #{conv_module_forward.3} parent=0 // pred_fallthru
    _
  // Predicated region
  $region10: #{conv_module_forward.3} parent=0 // pred_check
    _
  $region11: #{conv_module_forward.3} parent=0 // pred_check_branch
    %16 = sbr.rel (0) target = $region13
  $region12: #{conv_module_forward.3} parent=0 // pred_region
    _
  $region13: #{conv_module_forward.3} parent=0 // pred_fallthru
    _
  // Predicated region
  $region14: #{conv_module_forward.3} parent=0 // pred_check
    _
  $region15: #{conv_module_forward.3} parent=0 // pred_check_branch
    %18 = sbr.rel (0) target = $region17
  $region16: #{conv_module_forward.3} parent=0 // pred_region
    _
  $region17: #{conv_module_forward.3} parent=0 // pred_fallthru
    _
  // Predicated region
  $region18: #{conv_module_forward.3} parent=0 // pred_check
    _
  $region19: #{conv_module_forward.3} parent=0 // pred_check_branch
    %20 = sbr.rel (0) target = $region21
  $region20: #{conv_module_forward.3} parent=0 // pred_region
    _
  $region21: #{conv_module_forward.3} parent=0 // pred_fallthru
    _
  // Predicated region
  $region22: #{conv_module_forward.3} parent=0 // pred_check
    _
  $region23: #{conv_module_forward.3} parent=0 // pred_check_branch
    %22 = sbr.rel (0) target = $region25
  $region24: #{conv_module_forward.3} parent=0 // pred_region
    _
  $region25: #{conv_module_forward.3} parent=0 // pred_fallthru
    _
  %v24 = vld [vmem:[%s0] sm:$0xf]
  %v25 = vld [vmem:[%s0 + $0x4] sm:$0xf]
  %v26 = vld [vmem:[%s0 + $0x8] sm:$0xf]
  %v27 = vld [vmem:[%s0 + $0xc] sm:$0xf]
  %v28 = vld [vmem:[%s0 + $0x10] sm:$0xf]
  %v29 = vld [vmem:[%s0 + $0x14] sm:$0xf]
  %v30 = vld [vmem:[%s0 + $0x18] sm:$0xf]
  %v31 = vld [vmem:[%s0 + $0x1c] sm:$0xf]
  %v32 = vld [vmem:[%s0 + $0x20] sm:$0xf]
  %v33 = vld [vmem:[%s0 + $0x24] sm:$0xf]
  %v34 = vld [vmem:[%s0 + $0x28] sm:$0xf]
  %v35 = vld [vmem:[%s0 + $0x2c] sm:$0xf]
  %v36 = vld [vmem:[%s0 + $0x30] sm:$0xf]
  %v37 = vld [vmem:[%s0 + $0x34] sm:$0xf]
  %v38 = vld [vmem:[%s0 + $0x38] sm:$0xf]
  %v39 = vld [vmem:[%s0 + $0x3c] sm:$0xf]
  %v40 = vunpack.c.l.bf16 %v24
  %v41 = vunpack.c.l.bf16 %v25
  %v42 = vunpack.c.l.bf16 %v26
  %v43 = vunpack.c.l.bf16 %v27
  %v44 = vunpack.c.l.bf16 %v28
  %v45 = vunpack.c.l.bf16 %v29
  %v46 = vunpack.c.l.bf16 %v30
  %v47 = vunpack.c.l.bf16 %v31
  %v48 = vunpack.c.l.bf16 %v32
  %v49 = vunpack.c.l.bf16 %v33
  %v50 = vunpack.c.l.bf16 %v34
  %v51 = vunpack.c.l.bf16 %v35
  %v52 = vunpack.c.l.bf16 %v36
  %v53 = vunpack.c.l.bf16 %v37
  %v54 = vunpack.c.l.bf16 %v38
  %v55 = vunpack.c.l.bf16 %v39
  %v56 = vld [vmem:[%s2] sm:$0x1]
  %v58 = vlaneseq
  %v59 = vshrl.u32 %v58, 7
  %v60 = vsub.s32 0, %v59
  %v61 = vrot.slane %v56, %v60
  %v63 = vmul.f32 %v40, %v61
  %v64 = vmul.f32 %v41, %v61
  %v65 = vmul.f32 %v42, %v61
  %v66 = vmul.f32 %v43, %v61
  %v67 = vmul.f32 %v44, %v61
  %v68 = vmul.f32 %v45, %v61
  %v69 = vmul.f32 %v46, %v61
  %v70 = vmul.f32 %v47, %v61
  %v71 = vmul.f32 %v48, %v61
  %v72 = vmul.f32 %v49, %v61
  %v73 = vmul.f32 %v50, %v61
  %v74 = vmul.f32 %v51, %v61
  %v75 = vmul.f32 %v52, %v61
  %v76 = vmul.f32 %v53, %v61
  %v77 = vmul.f32 %v54, %v61
  %v78 = vmul.f32 %v55, %v61
  %v79 = vld [vmem:[%s3] sm:$0x1]
  %v81 = vlaneseq
  %v82 = vshrl.u32 %v81, 7
  %v83 = vsub.s32 0, %v82
  %v84 = vrot.slane %v79, %v83
  %v86 = vadd.f32 %v63, %v84
  %v87 = vadd.f32 %v64, %v84
  %v88 = vadd.f32 %v65, %v84
  %v89 = vadd.f32 %v66, %v84
  %v90 = vadd.f32 %v67, %v84
  %v91 = vadd.f32 %v68, %v84
  %v92 = vadd.f32 %v69, %v84
  %v93 = vadd.f32 %v70, %v84
  %v94 = vadd.f32 %v71, %v84
  %v95 = vadd.f32 %v72, %v84
  %v96 = vadd.f32 %v73, %v84
  %v97 = vadd.f32 %v74, %v84
  %v98 = vadd.f32 %v75, %v84
  %v99 = vadd.f32 %v76, %v84
  %v100 = vadd.f32 %v77, %v84
  %v101 = vadd.f32 %v78, %v84
  %v102 = vmax.f32 %v86, 0.0
  %v103 = vmax.f32 %v87, 0.0
  %v104 = vmax.f32 %v88, 0.0
  %v105 = vmax.f32 %v89, 0.0
  %v106 = vmax.f32 %v90, 0.0
  %v107 = vmax.f32 %v91, 0.0
  %v108 = vmax.f32 %v92, 0.0
  %v109 = vmax.f32 %v93, 0.0
  %v110 = vmax.f32 %v94, 0.0
  %v111 = vmax.f32 %v95, 0.0
  %v112 = vmax.f32 %v96, 0.0
  %v113 = vmax.f32 %v97, 0.0
  %v114 = vmax.f32 %v98, 0.0
  %v115 = vmax.f32 %v99, 0.0
  %v116 = vmax.f32 %v100, 0.0
  %v117 = vmax.f32 %v101, 0.0
  %v118 = vld [vmem:[%s4] sm:$0xf]
  %v119 = vld [vmem:[%s4 + $0x4] sm:$0xf]
  %v120 = vld [vmem:[%s4 + $0x8] sm:$0xf]
  %v121 = vld [vmem:[%s4 + $0xc] sm:$0xf]
  %v122 = vld [vmem:[%s4 + $0x10] sm:$0xf]
  %v123 = vld [vmem:[%s4 + $0x14] sm:$0xf]
  %v124 = vld [vmem:[%s4 + $0x18] sm:$0xf]
  %v125 = vld [vmem:[%s4 + $0x1c] sm:$0xf]
  %v126 = vld [vmem:[%s4 + $0x20] sm:$0xf]
  %v127 = vld [vmem:[%s4 + $0x24] sm:$0xf]
  %v128 = vld [vmem:[%s4 + $0x28] sm:$0xf]
  %v129 = vld [vmem:[%s4 + $0x2c] sm:$0xf]
  %v130 = vld [vmem:[%s4 + $0x30] sm:$0xf]
  %v131 = vld [vmem:[%s4 + $0x34] sm:$0xf]
  %v132 = vld [vmem:[%s4 + $0x38] sm:$0xf]
  %v133 = vld [vmem:[%s4 + $0x3c] sm:$0xf]
  %v134 = vpack.c.bf16 %v103, %v102
  %v135 = vpack.c.bf16 %v105, %v104
  %v136 = vpack.c.bf16 %v107, %v106
  %v137 = vpack.c.bf16 %v109, %v108
  %v138 = vpack.c.bf16 %v111, %v110
  %v139 = vpack.c.bf16 %v113, %v112
  %v140 = vpack.c.bf16 %v115, %v114
  %v141 = vpack.c.bf16 %v117, %v116
  %v142 = vld [vmem:[%s5] sm:$0x1]
  %v144 = vlaneseq
  %v145 = vshrl.u32 %v144, 7
  %v146 = vsub.s32 0, %v145
  %v147 = vrot.slane %v142, %v146
  %v165 = vunpack.c.l.b16 %v118
  %v166 = vunpack.c.l.b16 %v119
  %v167 = vunpack.c.l.b16 %v120
  %v168 = vunpack.c.l.b16 %v121
  %v169 = vunpack.c.l.b16 %v122
  %v170 = vunpack.c.l.b16 %v123
  %v171 = vunpack.c.l.b16 %v124
  %v172 = vunpack.c.l.b16 %v125
  %v173 = vunpack.c.l.b16 %v126
  %v174 = vunpack.c.l.b16 %v127
  %v175 = vunpack.c.l.b16 %v128
  %v176 = vunpack.c.l.b16 %v129
  %v177 = vunpack.c.l.b16 %v130
  %v178 = vunpack.c.l.b16 %v131
  %v179 = vunpack.c.l.b16 %v132
  %v180 = vunpack.c.l.b16 %v133
  %v181 = vpack.c.b16 %v166, %v165
  %v182 = vpack.c.b16 %v168, %v167
  %v183 = vpack.c.b16 %v170, %v169
  %v184 = vpack.c.b16 %v172, %v171
  %v185 = vpack.c.b16 %v174, %v173
  %v186 = vpack.c.b16 %v176, %v175
  %v187 = vpack.c.b16 %v178, %v177
  %v188 = vpack.c.b16 %v180, %v179
  %197 = vmatprep.subr.bf16.mxu0 0
  %198 = vmatpush1.bf16.msra.mxu0 %v181
  %199 = vmatprep.subr.bf16.mxu0 0
  %200 = vmatpush1.bf16.msra.mxu0 %v182
  %201 = vmatprep.subr.bf16.mxu0 0
  %202 = vmatpush1.bf16.msra.mxu0 %v183
  %203 = vmatprep.subr.bf16.mxu0 0
  %204 = vmatpush1.bf16.msra.mxu0 %v184
  %205 = vmatprep.subr.bf16.mxu0 0
  %206 = vmatpush1.bf16.msra.mxu0 %v185
  %207 = vmatprep.subr.bf16.mxu0 0
  %208 = vmatpush1.bf16.msra.mxu0 %v186
  %209 = vmatprep.subr.bf16.mxu0 0
  %210 = vmatpush1.bf16.msra.mxu0 %v187
  %211 = vmatprep.subr.bf16.mxu0 0
  %212 = vmatpush1.bf16.msra.mxu0 %v188
  %213 = vmatprep.subr.bf16.mxu0 0
  %214 = vmatpush1.bf16.msra.mxu0 0
  %215 = vmatprep.subr.bf16.mxu0 0
  %216 = vmatpush1.bf16.msra.mxu0 0
  %217 = vmatprep.subr.bf16.mxu0 0
  %218 = vmatpush1.bf16.msra.mxu0 0
  %219 = vmatprep.subr.bf16.mxu0 0
  %220 = vmatpush1.bf16.msra.mxu0 0
  %221 = vmatprep.subr.bf16.mxu0 0
  %222 = vmatpush1.bf16.msra.mxu0 0
  %223 = vmatprep.subr.bf16.mxu0 0
  %224 = vmatpush1.bf16.msra.mxu0 0
  %225 = vmatprep.subr.bf16.mxu0 0
  %226 = vmatpush1.bf16.msra.mxu0 0
  %227 = vmatprep.subr.bf16.mxu0 0
  %228 = vmatpush1.bf16.msra.mxu0 0
  %229 = vmatprep.mubr.bf16.mxu0 0
  %230 = vmatmul.mubr.bf16.gmra.mrb[0].mxu0 %v134
  %v231 = vpop.f32.mrb[0].mxu0
  %v232 = vadd.f32 %v147, %v231
  %v233 = vpop.f32.mrb[0].mxu0
  %v234 = vpop.f32.mrb[0].mxu0
  %v235 = vadd.f32 %v147, %v234
  %v236 = vpop.f32.mrb[0].mxu0
  %237 = vmatprep.mubr.bf16.mxu0 0
  %238 = vmatmul.mubr.bf16.gmra.mrb[0].mxu0 %v135
  %v239 = vpop.f32.mrb[0].mxu0
  %v240 = vadd.f32 %v147, %v239
  %v241 = vpop.f32.mrb[0].mxu0
  %v242 = vpop.f32.mrb[0].mxu0
  %v243 = vadd.f32 %v147, %v242
  %v244 = vpop.f32.mrb[0].mxu0
  %245 = vmatprep.mubr.bf16.mxu0 0
  %246 = vmatmul.mubr.bf16.gmra.mrb[0].mxu0 %v136
  %v247 = vpop.f32.mrb[0].mxu0
  %v248 = vadd.f32 %v147, %v247
  %v249 = vpop.f32.mrb[0].mxu0
  %v250 = vpop.f32.mrb[0].mxu0
  %v251 = vadd.f32 %v147, %v250
  %v252 = vpop.f32.mrb[0].mxu0
  %253 = vmatprep.mubr.bf16.mxu0 0
  %254 = vmatmul.mubr.bf16.gmra.mrb[0].mxu0 %v137
  %v255 = vpop.f32.mrb[0].mxu0
  %v256 = vadd.f32 %v147, %v255
  %v257 = vpop.f32.mrb[0].mxu0
  %v258 = vpop.f32.mrb[0].mxu0
  %v259 = vadd.f32 %v147, %v258
  %v260 = vpop.f32.mrb[0].mxu0
  %261 = vmatprep.mubr.bf16.mxu0 0
  %262 = vmatmul.mubr.bf16.gmra.mrb[0].mxu0 %v138
  %v263 = vpop.f32.mrb[0].mxu0
  %v264 = vadd.f32 %v147, %v263
  %v265 = vpop.f32.mrb[0].mxu0
  %v266 = vpop.f32.mrb[0].mxu0
  %v267 = vadd.f32 %v147, %v266
  %v268 = vpop.f32.mrb[0].mxu0
  %269 = vmatprep.mubr.bf16.mxu0 0
  %270 = vmatmul.mubr.bf16.gmra.mrb[0].mxu0 %v139
  %v271 = vpop.f32.mrb[0].mxu0
  %v272 = vadd.f32 %v147, %v271
  %v273 = vpop.f32.mrb[0].mxu0
  %v274 = vpop.f32.mrb[0].mxu0
  %v275 = vadd.f32 %v147, %v274
  %v276 = vpop.f32.mrb[0].mxu0
  %277 = vmatprep.mubr.bf16.mxu0 0
  %278 = vmatmul.mubr.bf16.gmra.mrb[0].mxu0 %v140
  %v279 = vpop.f32.mrb[0].mxu0
  %v280 = vadd.f32 %v147, %v279
  %v281 = vpop.f32.mrb[0].mxu0
  %v282 = vpop.f32.mrb[0].mxu0
  %v283 = vadd.f32 %v147, %v282
  %v284 = vpop.f32.mrb[0].mxu0
  %285 = vmatprep.mubr.bf16.mxu0 0
  %286 = vmatmul.mubr.bf16.gmra.mrb[0].mxu0 %v141
  %v287 = vpop.f32.mrb[0].mxu0
  %v288 = vadd.f32 %v147, %v287
  %v289 = vpop.f32.mrb[0].mxu0
  %v290 = vpop.f32.mrb[0].mxu0
  %v291 = vadd.f32 %v147, %v290
  %v292 = vpop.f32.mrb[0].mxu0
  %293 = vdwg.mxu0
  %v294 = vld [vmem:[%s1] sm:$0xf]
  %v295 = vld [vmem:[%s1 + $0x4] sm:$0xf]
  %v296 = vld [vmem:[%s1 + $0x8] sm:$0xf]
  %v297 = vld [vmem:[%s1 + $0xc] sm:$0xf]
  %v298 = vld [vmem:[%s1 + $0x10] sm:$0xf]
  %v299 = vld [vmem:[%s1 + $0x14] sm:$0xf]
  %v300 = vld [vmem:[%s1 + $0x18] sm:$0xf]
  %v301 = vld [vmem:[%s1 + $0x1c] sm:$0xf]
  %v302 = vld [vmem:[%s1 + $0x20] sm:$0xf]
  %v303 = vld [vmem:[%s1 + $0x24] sm:$0xf]
  %v304 = vld [vmem:[%s1 + $0x28] sm:$0xf]
  %v305 = vld [vmem:[%s1 + $0x2c] sm:$0xf]
  %v306 = vld [vmem:[%s1 + $0x30] sm:$0xf]
  %v307 = vld [vmem:[%s1 + $0x34] sm:$0xf]
  %v308 = vld [vmem:[%s1 + $0x38] sm:$0xf]
  %v309 = vld [vmem:[%s1 + $0x3c] sm:$0xf]
  %v310 = vunpack.c.l.bf16 %v294
  %v311 = vunpack.c.l.bf16 %v295
  %v312 = vunpack.c.l.bf16 %v296
  %v313 = vunpack.c.l.bf16 %v297
  %v314 = vunpack.c.l.bf16 %v298
  %v315 = vunpack.c.l.bf16 %v299
  %v316 = vunpack.c.l.bf16 %v300
  %v317 = vunpack.c.l.bf16 %v301
  %v318 = vunpack.c.l.bf16 %v302
  %v319 = vunpack.c.l.bf16 %v303
  %v320 = vunpack.c.l.bf16 %v304
  %v321 = vunpack.c.l.bf16 %v305
  %v322 = vunpack.c.l.bf16 %v306
  %v323 = vunpack.c.l.bf16 %v307
  %v324 = vunpack.c.l.bf16 %v308
  %v325 = vunpack.c.l.bf16 %v309
  %327 = vset.pattern.permute.xlu0 0
  %328 = vperm.xlu0 %327, %v310
  %v329 = vpop.permute.xlu0 %328
  %332 = vset.pattern.permute.xlu0 0
  %333 = vperm.xlu0 %332, %v311
  %v334 = vpop.permute.xlu0 %333
  %337 = vset.pattern.permute.xlu0 0
  %338 = vperm.xlu0 %337, %v312
  %v339 = vpop.permute.xlu0 %338
  %342 = vset.pattern.permute.xlu0 0
  %343 = vperm.xlu0 %342, %v313
  %v344 = vpop.permute.xlu0 %343
  %347 = vset.pattern.permute.xlu0 0
  %348 = vperm.xlu0 %347, %v314
  %v349 = vpop.permute.xlu0 %348
  %352 = vset.pattern.permute.xlu0 0
  %353 = vperm.xlu0 %352, %v315
  %v354 = vpop.permute.xlu0 %353
  %357 = vset.pattern.permute.xlu0 0
  %358 = vperm.xlu0 %357, %v316
  %v359 = vpop.permute.xlu0 %358
  %362 = vset.pattern.permute.xlu0 0
  %363 = vperm.xlu0 %362, %v317
  %v364 = vpop.permute.xlu0 %363
  %367 = vset.pattern.permute.xlu0 0
  %368 = vperm.xlu0 %367, %v318
  %v369 = vpop.permute.xlu0 %368
  %372 = vset.pattern.permute.xlu0 0
  %373 = vperm.xlu0 %372, %v319
  %v374 = vpop.permute.xlu0 %373
  %377 = vset.pattern.permute.xlu0 0
  %378 = vperm.xlu0 %377, %v320
  %v379 = vpop.permute.xlu0 %378
  %382 = vset.pattern.permute.xlu0 0
  %383 = vperm.xlu0 %382, %v321
  %v384 = vpop.permute.xlu0 %383
  %387 = vset.pattern.permute.xlu0 0
  %388 = vperm.xlu0 %387, %v322
  %v389 = vpop.permute.xlu0 %388
  %392 = vset.pattern.permute.xlu0 0
  %393 = vperm.xlu0 %392, %v323
  %v394 = vpop.permute.xlu0 %393
  %397 = vset.pattern.permute.xlu0 0
  %398 = vperm.xlu0 %397, %v324
  %v399 = vpop.permute.xlu0 %398
  %402 = vset.pattern.permute.xlu0 0
  %403 = vperm.xlu0 %402, %v325
  %v404 = vpop.permute.xlu0 %403
  %v406 = vmul.f32 %v232, %v329
  %v407 = vmul.f32 %v235, %v334
  %v408 = vmul.f32 %v240, %v339
  %v409 = vmul.f32 %v243, %v344
  %v410 = vmul.f32 %v248, %v349
  %v411 = vmul.f32 %v251, %v354
  %v412 = vmul.f32 %v256, %v359
  %v413 = vmul.f32 %v259, %v364
  %v414 = vmul.f32 %v264, %v369
  %v415 = vmul.f32 %v267, %v374
  %v416 = vmul.f32 %v272, %v379
  %v417 = vmul.f32 %v275, %v384
  %v418 = vmul.f32 %v280, %v389
  %v419 = vmul.f32 %v283, %v394
  %v420 = vmul.f32 %v288, %v399
  %v421 = vmul.f32 %v291, %v404
  %422 = vst [vmem:[%s6] sm:$0xff] %v406
  %423 = vst [vmem:[%s6 + $0x8] sm:$0xff] %v407
  %424 = vst [vmem:[%s6 + $0x10] sm:$0xff] %v408
  %425 = vst [vmem:[%s6 + $0x18] sm:$0xff] %v409
  %426 = vst [vmem:[%s6 + $0x20] sm:$0xff] %v410
  %427 = vst [vmem:[%s6 + $0x28] sm:$0xff] %v411
  %428 = vst [vmem:[%s6 + $0x30] sm:$0xff] %v412
  %429 = vst [vmem:[%s6 + $0x38] sm:$0xff] %v413
  %430 = vst [vmem:[%s6 + $0x40] sm:$0xff] %v414
  %431 = vst [vmem:[%s6 + $0x48] sm:$0xff] %v415
  %432 = vst [vmem:[%s6 + $0x50] sm:$0xff] %v416
  %433 = vst [vmem:[%s6 + $0x58] sm:$0xff] %v417
  %434 = vst [vmem:[%s6 + $0x60] sm:$0xff] %v418
  %435 = vst [vmem:[%s6 + $0x68] sm:$0xff] %v419
  %436 = vst [vmem:[%s6 + $0x70] sm:$0xff] %v420
  %437 = vst [vmem:[%s6 + $0x78] sm:$0xff] %v421
  // Predicated region
  $region26: #{conv_module_forward.3} parent=0 // pred_check
    _
  $region27: #{conv_module_forward.3} parent=0 // pred_check_branch
    %439 = sbr.rel (0) target = $region29
  $region28: #{conv_module_forward.3} parent=0 // pred_region
    _
  $region29: #{conv_module_forward.3} parent=0 // pred_fallthru
    _
  // Predicated region
  $region30: #{conv_module_forward.3} parent=0 // pred_check
    _
  $region31: #{conv_module_forward.3} parent=0 // pred_check_branch
    %441 = sbr.rel (0) target = $region33
  $region32: #{conv_module_forward.3} parent=0 // pred_region
    _
  $region33: #{conv_module_forward.3} parent=0 // pred_fallthru
    _

// kernel: conv_module_forward.2
$region0: #{conv_module_forward.2}
  #allocation0 [shape = 'u32[]', space=smem, size = 0x4, offset = 0x4, fixed_abs, tag = 'smem constant byte address 0x4 - core index']
  #allocation1 [shape = 'u32[144,128]{1,0:T(1,128)}', space=vmem, size = 0x12000, scoped, tag = 'internal scratch']
  #allocation2 [shape = 'f32[48,128]{1,0:T(8,128)}', space=vmem, size = 0x6000, scoped, tag = 'scratch operand']
  #allocation3 [shape = 'f32[8,128]{1,0:T(8,128)}', space=vmem, size = 0x1000, scoped, tag = 'scratch operand']
  %s0 = inlined_call_operand.vmem [shape: bf16[2,64,128], index: 0, kind: input, shape index: {}, may-alias: {0,1}]
  %s1 = inlined_call_operand.vmem [shape: bf16[2,64,128], index: 1, kind: input, shape index: {}, may-alias: {0,1}]
  %s2 = inlined_call_operand.vmem [shape: bf16[2,64,1], index: 2, kind: input, shape index: {}, may-alias: {2,3}]
  %s3 = inlined_call_operand.vmem [shape: bf16[2,64,1], index: 3, kind: input, shape index: {}, may-alias: {2,3}]
  %s4 = inlined_call_operand.vmem [shape: bf16[128,256], index: 4, kind: input, shape index: {}]
  %s5 = inlined_call_operand.vmem [shape: f32[1,256], index: 5, kind: input, shape index: {}]
  %s6 = inlined_call_operand.vmem [shape: f32[15,128], index: 6, kind: input, shape index: {}]
  %s7 = inlined_call_operand.vmem [shape: bf16[2,64,128], index: 7, kind: output, shape index: {0}]
  %s8 = inlined_call_operand.vmem [shape: f32[2,2,1,128], index: 8, kind: output, shape index: {1}]
  %s9 = inlined_call_operand.vmem [shape: f32[2,2,1,128], index: 9, kind: output, shape index: {2}]
  %10 = xla_tuple %s7, %s8, %s9
  %s11 = sld [smem:[#allocation0]]
  $region81: #{conv_module_forward.2} parent=0
    _
  %s13 = ssub.s32 1, %s11
  %s14 = scalar_select 0, %s13, %s11
  loop: start=0, step=1, limit=6
  $region2: #{conv_module_forward.2} parent=0 // loop_pre_header
    _
  $region3: #{conv_module_forward.2} parent=0 // loop_header
    %s16 = sphi 0, %s20
    %p17 = scmp.ge.s32.totalorder %s16, 6
    %s23 = sphi 0, %s35
    %s24 = sphi 0, %s31
    %s25 = sphi 0, %s23
    %s26 = sphi 0, %s24
    %s27 = sphi 0, %s25
    %s28 = sphi 0, %s26
    %s40 = sphi 0, %s42
    %s43 = sphi 0, %s40
    %s44 = sphi 0, %s43
    %s60 = sphi 0, %s44
    %s76 = sphi 0, %s78
    %s79 = sphi 0, %s76
    %s80 = sphi 0, %s79
    %s96 = sphi 0, %s80
    %s104 = sphi 0, %s106
    %s107 = sphi 0, %s104
    %s108 = sphi 0, %s107
    %s124 = sphi 0, %s108
    %s140 = sphi 0, %s142
    %s143 = sphi 0, %s140
    %s144 = sphi 0, %s143
    %s160 = sphi 0, %s144
    %s164 = sphi 0, %s164
    %s166 = sphi 0, %s164
    %s167 = sphi 0, %s166
    %s181 = sphi 0, %s167
    %s185 = sphi 0, %s185
    %s187 = sphi 0, %s185
    %s188 = sphi 0, %s187
    %s202 = sphi 0, %s188
    %s206 = sphi 0, %s206
    %s208 = sphi 0, %s206
    %s209 = sphi 0, %s208
    %s223 = sphi 0, %s209
    %s231 = sphi 0, %s233
    %s234 = sphi 0, %s231
    %s235 = sphi 0, %s234
    %s251 = sphi 0, %s235
    %s259 = sphi 0, %s261
    %s262 = sphi 0, %s259
    %s263 = sphi 0, %s262
    %s279 = sphi 0, %s263
    %s287 = sphi 0, %s289
    %s290 = sphi 0, %s287
    %s291 = sphi 0, %s290
    %s307 = sphi 0, %s291
  $region4: #{conv_module_forward.2} parent=0 // loop_header_branch
    %19 = sbr.rel (%p17) target = $region8
  $region5: #{conv_module_forward.2} parent=0 // loop_body
    %s21 = ssub.s32 %s16, 1
    %s22 = ssub.s32 %s16, 2
    %s29 = sadd.s32 1, %s24
    %p30 = scmp.ge.s32.totalorder %s29, 2
    %s31 = scalar_select %p30, 0, %s29
    %s32 = sadd.s32 1, %s23
    %s33 = scalar_select %p30, %s32, %s23
    %p34 = scmp.ge.s32.totalorder %s33, 2
    %s35 = scalar_select %p34, 0, %s33
    %s36 = ssub.s32 %s23, %s35
    %s37 = ssub.s32 %s24, %s31
    %s38 = sor.u32 %s36, %s37
    %p39 = scmp.eq.s32.totalorder %s38, 0
    %s41 = sadd.s32 %s40, 1
    %s42 = scalar_select %p39, %s40, %s41
    %p45 = pneg %p39
    %p46 = scmp.eq.s32.totalorder %s16, 3
    %p47 = por %p45, %p46
    %p48 = scmp.ne.s32.totalorder %s40, %s43
    %p49 = scmp.eq.s32.totalorder %s16, 0
    %p50 = por %p48, %p49
    %p51 = scmp.ne.s32.totalorder %s40, %s43
    %p52 = scmp.eq.s32.totalorder %s21, 3
    %p53 = por %p51, %p52
    %p54 = scmp.ne.s32.totalorder %s43, %s44
    %p55 = scmp.eq.s32.totalorder %s21, 0
    %p56 = por %p54, %p55
    %p57 = scmp.ne.s32.totalorder %s43, %s44
    %p58 = scmp.eq.s32.totalorder %s22, 3
    %p59 = por %p57, %p58
    %p61 = scmp.ne.s32.totalorder %s44, %s60
    %p62 = scmp.eq.s32.totalorder %s22, 0
    %p63 = por %p61, %p62
    %s64 = sadd.s32 %s24, 1
    %s65 = smul.u32 %s64, 4
    %p66 = scmp.lt.s32.totalorder %s65, 7
    %s67 = scalar_select %p66, %s65, 7
    %s68 = sadd.s32 %s31, 1
    %s69 = smul.u32 %s68, 4
    %p70 = scmp.lt.s32.totalorder %s69, 7
    %s71 = scalar_select %p70, %s69, 7
    %s72 = ssub.s32 %s23, %s35
    %s73 = ssub.s32 %s67, %s71
    %s74 = sor.u32 %s72, %s73
    %p75 = scmp.eq.s32.totalorder %s74, 0
    %s77 = sadd.s32 %s76, 1
    %s78 = scalar_select %p75, %s76, %s77
    %p81 = pneg %p75
    %p82 = scmp.eq.s32.totalorder %s16, 3
    %p83 = por %p81, %p82
    %p84 = scmp.ne.s32.totalorder %s76, %s79
    %p85 = scmp.eq.s32.totalorder %s16, 0
    %p86 = por %p84, %p85
    %p87 = scmp.ne.s32.totalorder %s76, %s79
    %p88 = scmp.eq.s32.totalorder %s21, 3
    %p89 = por %p87, %p88
    %p90 = scmp.ne.s32.totalorder %s79, %s80
    %p91 = scmp.eq.s32.totalorder %s21, 0
    %p92 = por %p90, %p91
    %p93 = scmp.ne.s32.totalorder %s79, %s80
    %p94 = scmp.eq.s32.totalorder %s22, 3
    %p95 = por %p93, %p94
    %p97 = scmp.ne.s32.totalorder %s80, %s96
    %p98 = scmp.eq.s32.totalorder %s22, 0
    %p99 = por %p97, %p98
    %s100 = ssub.s32 %s23, %s35
    %s101 = ssub.s32 %s24, %s31
    %s102 = sor.u32 %s100, %s101
    %p103 = scmp.eq.s32.totalorder %s102, 0
    %s105 = sadd.s32 %s104, 1
    %s106 = scalar_select %p103, %s104, %s105
    %p109 = pneg %p103
    %p110 = scmp.eq.s32.totalorder %s16, 3
    %p111 = por %p109, %p110
    %p112 = scmp.ne.s32.totalorder %s104, %s107
    %p113 = scmp.eq.s32.totalorder %s16, 0
    %p114 = por %p112, %p113
    %p115 = scmp.ne.s32.totalorder %s104, %s107
    %p116 = scmp.eq.s32.totalorder %s21, 3
    %p117 = por %p115, %p116
    %p118 = scmp.ne.s32.totalorder %s107, %s108
    %p119 = scmp.eq.s32.totalorder %s21, 0
    %p120 = por %p118, %p119
    %p121 = scmp.ne.s32.totalorder %s107, %s108
    %p122 = scmp.eq.s32.totalorder %s22, 3
    %p123 = por %p121, %p122
    %p125 = scmp.ne.s32.totalorder %s108, %s124
    %p126 = scmp.eq.s32.totalorder %s22, 0
    %p127 = por %p125, %p126
    %s128 = sadd.s32 %s24, 1
    %s129 = smul.u32 %s128, 4
    %p130 = scmp.lt.s32.totalorder %s129, 7
    %s131 = scalar_select %p130, %s129, 7
    %s132 = sadd.s32 %s31, 1
    %s133 = smul.u32 %s132, 4
    %p134 = scmp.lt.s32.totalorder %s133, 7
    %s135 = scalar_select %p134, %s133, 7
    %s136 = ssub.s32 %s23, %s35
    %s137 = ssub.s32 %s131, %s135
    %s138 = sor.u32 %s136, %s137
    %p139 = scmp.eq.s32.totalorder %s138, 0
    %s141 = sadd.s32 %s140, 1
    %s142 = scalar_select %p139, %s140, %s141
    %p145 = pneg %p139
    %p146 = scmp.eq.s32.totalorder %s16, 3
    %p147 = por %p145, %p146
    %p148 = scmp.ne.s32.totalorder %s140, %s143
    %p149 = scmp.eq.s32.totalorder %s16, 0
    %p150 = por %p148, %p149
    %p151 = scmp.ne.s32.totalorder %s140, %s143
    %p152 = scmp.eq.s32.totalorder %s21, 3
    %p153 = por %p151, %p152
    %p154 = scmp.ne.s32.totalorder %s143, %s144
    %p155 = scmp.eq.s32.totalorder %s21, 0
    %p156 = por %p154, %p155
    %p157 = scmp.ne.s32.totalorder %s143, %s144
    %p158 = scmp.eq.s32.totalorder %s22, 3
    %p159 = por %p157, %p158
    %p161 = scmp.ne.s32.totalorder %s144, %s160
    %p162 = scmp.eq.s32.totalorder %s22, 0
    %p163 = por %p161, %p162
    %s165 = sadd.s32 %s164, 1
    %p168 = scmp.eq.s32.totalorder %s16, 3
    %p169 = scmp.ne.s32.totalorder %s164, %s166
    %p170 = scmp.eq.s32.totalorder %s16, 0
    %p171 = por %p169, %p170
    %p172 = scmp.ne.s32.totalorder %s164, %s166
    %p173 = scmp.eq.s32.totalorder %s21, 3
    %p174 = por %p172, %p173
    %p175 = scmp.ne.s32.totalorder %s166, %s167
    %p176 = scmp.eq.s32.totalorder %s21, 0
    %p177 = por %p175, %p176
    %p178 = scmp.ne.s32.totalorder %s166, %s167
    %p179 = scmp.eq.s32.totalorder %s22, 3
    %p180 = por %p178, %p179
    %p182 = scmp.ne.s32.totalorder %s167, %s181
    %p183 = scmp.eq.s32.totalorder %s22, 0
    %p184 = por %p182, %p183
    %s186 = sadd.s32 %s185, 1
    %p189 = scmp.eq.s32.totalorder %s16, 3
    %p190 = scmp.ne.s32.totalorder %s185, %s187
    %p191 = scmp.eq.s32.totalorder %s16, 0
    %p192 = por %p190, %p191
    %p193 = scmp.ne.s32.totalorder %s185, %s187
    %p194 = scmp.eq.s32.totalorder %s21, 3
    %p195 = por %p193, %p194
    %p196 = scmp.ne.s32.totalorder %s187, %s188
    %p197 = scmp.eq.s32.totalorder %s21, 0
    %p198 = por %p196, %p197
    %p199 = scmp.ne.s32.totalorder %s187, %s188
    %p200 = scmp.eq.s32.totalorder %s22, 3
    %p201 = por %p199, %p200
    %p203 = scmp.ne.s32.totalorder %s188, %s202
    %p204 = scmp.eq.s32.totalorder %s22, 0
    %p205 = por %p203, %p204
    %s207 = sadd.s32 %s206, 1
    %p210 = scmp.eq.s32.totalorder %s16, 3
    %p211 = scmp.ne.s32.totalorder %s206, %s208
    %p212 = scmp.eq.s32.totalorder %s16, 0
    %p213 = por %p211, %p212
    %p214 = scmp.ne.s32.totalorder %s206, %s208
    %p215 = scmp.eq.s32.totalorder %s21, 3
    %p216 = por %p214, %p215
    %p217 = scmp.ne.s32.totalorder %s208, %s209
    %p218 = scmp.eq.s32.totalorder %s21, 0
    %p219 = por %p217, %p218
    %p220 = scmp.ne.s32.totalorder %s208, %s209
    %p221 = scmp.eq.s32.totalorder %s22, 3
    %p222 = por %p220, %p221
    %p224 = scmp.ne.s32.totalorder %s209, %s223
    %p225 = scmp.eq.s32.totalorder %s22, 0
    %p226 = por %p224, %p225
    %s227 = ssub.s32 %s23, %s35
    %s228 = ssub.s32 %s24, %s31
    %s229 = sor.u32 %s227, %s228
    %p230 = scmp.eq.s32.totalorder %s229, 0
    %s232 = sadd.s32 %s231, 1
    %s233 = scalar_select %p230, %s231, %s232
    %p236 = pneg %p230
    %p237 = scmp.eq.s32.totalorder %s16, 3
    %p238 = por %p236, %p237
    %p239 = scmp.ne.s32.totalorder %s231, %s234
    %p240 = scmp.eq.s32.totalorder %s16, 0
    %p241 = por %p239, %p240
    %p242 = scmp.ne.s32.totalorder %s231, %s234
    %p243 = scmp.eq.s32.totalorder %s21, 3
    %p244 = por %p242, %p243
    %p245 = scmp.ne.s32.totalorder %s234, %s235
    %p246 = scmp.eq.s32.totalorder %s21, 0
    %p247 = por %p245, %p246
    %p248 = scmp.ne.s32.totalorder %s234, %s235
    %p249 = scmp.eq.s32.totalorder %s22, 3
    %p250 = por %p248, %p249
    %p252 = scmp.ne.s32.totalorder %s235, %s251
    %p253 = scmp.eq.s32.totalorder %s22, 0
    %p254 = por %p252, %p253
    %s255 = ssub.s32 %s23, %s35
    %s256 = ssub.s32 %s24, %s31
    %s257 = sor.u32 %s255, %s256
    %p258 = scmp.eq.s32.totalorder %s257, 0
    %s260 = sadd.s32 %s259, 1
    %s261 = scalar_select %p258, %s259, %s260
    %p264 = pneg %p258
    %p265 = scmp.eq.s32.totalorder %s16, 3
    %p266 = por %p264, %p265
    %p267 = scmp.ne.s32.totalorder %s259, %s262
    %p268 = scmp.eq.s32.totalorder %s16, 0
    %p269 = por %p267, %p268
    %p270 = scmp.ne.s32.totalorder %s259, %s262
    %p271 = scmp.eq.s32.totalorder %s21, 3
    %p272 = por %p270, %p271
    %p273 = scmp.ne.s32.totalorder %s262, %s263
    %p274 = scmp.eq.s32.totalorder %s21, 0
    %p275 = por %p273, %p274
    %p276 = scmp.ne.s32.totalorder %s262, %s263
    %p277 = scmp.eq.s32.totalorder %s22, 3
    %p278 = por %p276, %p277
    %p280 = scmp.ne.s32.totalorder %s263, %s279
    %p281 = scmp.eq.s32.totalorder %s22, 0
    %p282 = por %p280, %p281
    %s283 = ssub.s32 %s23, %s35
    %s284 = ssub.s32 %s24, %s31
    %s285 = sor.u32 %s283, %s284
    %p286 = scmp.eq.s32.totalorder %s285, 0
    %s288 = sadd.s32 %s287, 1
    %s289 = scalar_select %p286, %s287, %s288
    %p292 = pneg %p286
    %p293 = scmp.eq.s32.totalorder %s16, 3
    %p294 = por %p292, %p293
    %p295 = scmp.ne.s32.totalorder %s287, %s290
    %p296 = scmp.eq.s32.totalorder %s16, 0
    %p297 = por %p295, %p296
    %p298 = scmp.ne.s32.totalorder %s287, %s290
    %p299 = scmp.eq.s32.totalorder %s21, 3
    %p300 = por %p298, %p299
    %p301 = scmp.ne.s32.totalorder %s290, %s291
    %p302 = scmp.eq.s32.totalorder %s21, 0
    %p303 = por %p301, %p302
    %p304 = scmp.ne.s32.totalorder %s290, %s291
    %p305 = scmp.eq.s32.totalorder %s22, 3
    %p306 = por %p304, %p305
    %p308 = scmp.ne.s32.totalorder %s291, %s307
    %p309 = scmp.eq.s32.totalorder %s22, 0
    %p310 = por %p308, %p309
    %p311 = scmp.le.s32.totalorder 1, %s16
    %p312 = scmp.lt.s32.totalorder %s16, 5
    %p313 = pnand %p311, %p312
    %p314 = pneg %p313
    // Predicated region
    $region9: #{conv_module_forward.2} parent=5 // pred_check
      _
    $region10: #{conv_module_forward.2} parent=5 // pred_check_branch
      %316 = sbr.rel (%p313) target = $region12
    $region11: #{conv_module_forward.2} parent=5 // pred_region
      %s317 = ssub.s32 %s16, 1
      // Predicated region
      $region13: #{conv_module_forward.2} parent=11 // pred_check
        %p318 = pneg %p177
      $region14: #{conv_module_forward.2} parent=11 // pred_check_branch
        %320 = sbr.rel (%p318) target = $region16
      $region15: #{conv_module_forward.2} parent=11 // pred_region
        _
      $region16: #{conv_module_forward.2} parent=11 // pred_fallthru
        _
      // Predicated region
      $region17: #{conv_module_forward.2} parent=11 // pred_check
        %p321 = pneg %p198
      $region18: #{conv_module_forward.2} parent=11 // pred_check_branch
        %323 = sbr.rel (%p321) target = $region20
      $region19: #{conv_module_forward.2} parent=11 // pred_region
        _
      $region20: #{conv_module_forward.2} parent=11 // pred_fallthru
        _
      // Predicated region
      $region21: #{conv_module_forward.2} parent=11 // pred_check
        %p324 = pneg %p219
      $region22: #{conv_module_forward.2} parent=11 // pred_check_branch
        %326 = sbr.rel (%p324) target = $region24
      $region23: #{conv_module_forward.2} parent=11 // pred_region
        _
      $region24: #{conv_module_forward.2} parent=11 // pred_fallthru
        _
    $region12: #{conv_module_forward.2} parent=5 // pred_fallthru
      _
    %p327 = scmp.lt.s32.totalorder %s16, 4
    // Predicated region
    $region25: #{conv_module_forward.2} parent=5 // pred_check
      %p328 = pneg %p327
    $region26: #{conv_module_forward.2} parent=5 // pred_check_branch
      %330 = sbr.rel (%p328) target = $region28
    $region27: #{conv_module_forward.2} parent=5 // pred_region
      // Predicated region
      $region29: #{conv_module_forward.2} parent=27 // pred_check
        %p331 = pneg %p50
      $region30: #{conv_module_forward.2} parent=27 // pred_check_branch
        %333 = sbr.rel (%p331) target = $region32
      $region31: #{conv_module_forward.2} parent=27 // pred_region
        %s334 = smul.u32 4, %s24
        %p335 = scmp.lt.s32.totalorder %s23, 1
        %s336 = scalar_select %p335, %s23, 1
        %p337 = scmp.lt.s32.totalorder %s334, 7
        %s338 = scalar_select %p337, %s334, 7
        %s339 = smul.addr %s336, 8
        %s340 = sadd.s32 %s338, %s339
        %s341 = smul.addr %s340, 4
        %s342 = scalar_lea.vmem %s0, %s341
        %s343 = smul.u32 4, %s24
      $region32: #{conv_module_forward.2} parent=27 // pred_fallthru
        _
      // Predicated region
      $region33: #{conv_module_forward.2} parent=27 // pred_check
        %p344 = pneg %p86
      $region34: #{conv_module_forward.2} parent=27 // pred_check_branch
        %346 = sbr.rel (%p344) target = $region36
      $region35: #{conv_module_forward.2} parent=27 // pred_region
        %s347 = sadd.s32 %s24, 1
        %s348 = smul.u32 %s347, 4
        %p349 = scmp.lt.s32.totalorder %s348, 7
        %s350 = scalar_select %p349, %s348, 7
        %p351 = scmp.lt.s32.totalorder %s23, 1
        %s352 = scalar_select %p351, %s23, 1
        %p353 = scmp.lt.s32.totalorder %s350, 7
        %s354 = scalar_select %p353, %s350, 7
        %s355 = smul.addr %s352, 8
        %s356 = sadd.s32 %s354, %s355
        %s357 = smul.addr %s356, 4
        %s358 = scalar_lea.vmem %s1, %s357
        %s359 = sadd.s32 %s24, 1
        %s360 = smul.u32 %s359, 4
        %p361 = scmp.lt.s32.totalorder %s360, 7
        %s362 = scalar_select %p361, %s360, 7
      $region36: #{conv_module_forward.2} parent=27 // pred_fallthru
        _
      // Predicated region
      $region37: #{conv_module_forward.2} parent=27 // pred_check
        %p363 = pneg %p114
      $region38: #{conv_module_forward.2} parent=27 // pred_check_branch
        %365 = sbr.rel (%p363) target = $region40
      $region39: #{conv_module_forward.2} parent=27 // pred_region
        %s366 = smul.u32 4, %s24
        %p367 = scmp.lt.s32.totalorder %s23, 1
        %s368 = scalar_select %p367, %s23, 1
        %p369 = scmp.lt.s32.totalorder %s366, 7
        %s370 = scalar_select %p369, %s366, 7
        %s371 = smul.addr %s368, 8
        %s372 = sadd.s32 %s370, %s371
        %s373 = smul.addr %s372, 4
        %s374 = scalar_lea.vmem %s2, %s373
        %s375 = smul.u32 4, %s24
      $region40: #{conv_module_forward.2} parent=27 // pred_fallthru
        _
      // Predicated region
      $region41: #{conv_module_forward.2} parent=27 // pred_check
        %p376 = pneg %p150
      $region42: #{conv_module_forward.2} parent=27 // pred_check_branch
        %378 = sbr.rel (%p376) target = $region44
      $region43: #{conv_module_forward.2} parent=27 // pred_region
        %s379 = sadd.s32 %s24, 1
        %s380 = smul.u32 %s379, 4
        %p381 = scmp.lt.s32.totalorder %s380, 7
        %s382 = scalar_select %p381, %s380, 7
        %p383 = scmp.lt.s32.totalorder %s23, 1
        %s384 = scalar_select %p383, %s23, 1
        %p385 = scmp.lt.s32.totalorder %s382, 7
        %s386 = scalar_select %p385, %s382, 7
        %s387 = smul.addr %s384, 8
        %s388 = sadd.s32 %s386, %s387
        %s389 = smul.addr %s388, 4
        %s390 = scalar_lea.vmem %s3, %s389
        %s391 = sadd.s32 %s24, 1
        %s392 = smul.u32 %s391, 4
        %p393 = scmp.lt.s32.totalorder %s392, 7
        %s394 = scalar_select %p393, %s392, 7
      $region44: #{conv_module_forward.2} parent=27 // pred_fallthru
        _
    $region28: #{conv_module_forward.2} parent=5 // pred_fallthru
      _
    %p395 = scmp.le.s32.totalorder 1, %s16
    %p396 = scmp.lt.s32.totalorder %s16, 5
    %p397 = pnand %p395, %p396
    %p398 = pneg %p397
    // Predicated region
    $region45: #{conv_module_forward.2} parent=5 // pred_check
      _
    $region46: #{conv_module_forward.2} parent=5 // pred_check_branch
      %400 = sbr.rel (%p397) target = $region48
    $region47: #{conv_module_forward.2} parent=5 // pred_region
      %s401 = ssub.s32 %s16, 1
      %s402 = smul.u32 4, %s26
      %p403 = scmp.lt.s32.totalorder %s25, 1
      %s404 = scalar_select %p403, %s25, 1
      %p405 = scmp.lt.s32.totalorder %s402, 7
      %s406 = scalar_select %p405, %s402, 7
      %s407 = smul.addr %s404, 8
      %s408 = sadd.s32 %s406, %s407
      %s409 = smul.addr %s408, 4
      %s410 = scalar_lea.vmem %s0, %s409
      %p411 = pneg %p56
      %p412 = pneg %p53
      %s413 = sadd.s32 %s26, 1
      %s414 = smul.u32 %s413, 4
      %p415 = scmp.lt.s32.totalorder %s414, 7
      %s416 = scalar_select %p415, %s414, 7
      %p417 = scmp.lt.s32.totalorder %s25, 1
      %s418 = scalar_select %p417, %s25, 1
      %p419 = scmp.lt.s32.totalorder %s416, 7
      %s420 = scalar_select %p419, %s416, 7
      %s421 = smul.addr %s418, 8
      %s422 = sadd.s32 %s420, %s421
      %s423 = smul.addr %s422, 4
      %s424 = scalar_lea.vmem %s1, %s423
      %p425 = pneg %p92
      %p426 = pneg %p89
      %s427 = smul.u32 4, %s26
      %p428 = scmp.lt.s32.totalorder %s25, 1
      %s429 = scalar_select %p428, %s25, 1
      %p430 = scmp.lt.s32.totalorder %s427, 7
      %s431 = scalar_select %p430, %s427, 7
      %s432 = smul.addr %s429, 8
      %s433 = sadd.s32 %s431, %s432
      %s434 = smul.addr %s433, 4
      %s435 = scalar_lea.vmem %s2, %s434
      %p436 = pneg %p120
      %p437 = pneg %p117
      %s438 = sadd.s32 %s26, 1
      %s439 = smul.u32 %s438, 4
      %p440 = scmp.lt.s32.totalorder %s439, 7
      %s441 = scalar_select %p440, %s439, 7
      %p442 = scmp.lt.s32.totalorder %s25, 1
      %s443 = scalar_select %p442, %s25, 1
      %p444 = scmp.lt.s32.totalorder %s441, 7
      %s445 = scalar_select %p444, %s441, 7
      %s446 = smul.addr %s443, 8
      %s447 = sadd.s32 %s445, %s446
      %s448 = smul.addr %s447, 4
      %s449 = scalar_lea.vmem %s3, %s448
      %p450 = pneg %p156
      %p451 = pneg %p153
      %p452 = pneg %p177
      %p453 = pneg %p174
      %p454 = pneg %p198
      %p455 = pneg %p195
      %p456 = pneg %p219
      %p457 = pneg %p216
      %p458 = pneg %p247
      %p459 = pneg %p244
      %s460 = smul.u32 4, %s26
      %p461 = scmp.lt.s32.totalorder %s25, 1
      %s462 = scalar_select %p461, %s25, 1
      %p463 = scmp.lt.s32.totalorder %s460, 7
      %s464 = scalar_select %p463, %s460, 7
      %s465 = smul.addr %s462, 8
      %s466 = sadd.s32 %s464, %s465
      %s467 = smul.addr %s466, 4
      %s468 = scalar_lea.vmem %s7, %s467
      %p469 = pneg %p275
      %p470 = pneg %p272
      %p471 = scmp.lt.s32.totalorder %s25, 1
      %s472 = scalar_select %p471, %s25, 1
      %p473 = scmp.lt.s32.totalorder %s26, 1
      %s474 = scalar_select %p473, %s26, 1
      %s475 = smul.addr %s472, 2
      %s476 = sadd.s32 %s474, %s475
      %s477 = scalar_lea.vmem %s8, %s476
      %p478 = pneg %p303
      %p479 = pneg %p300
      %p480 = scmp.lt.s32.totalorder %s25, 1
      %s481 = scalar_select %p480, %s25, 1
      %p482 = scmp.lt.s32.totalorder %s26, 1
      %s483 = scalar_select %p482, %s26, 1
      %s484 = smul.addr %s481, 2
      %s485 = sadd.s32 %s483, %s484
      %s486 = scalar_lea.vmem %s9, %s485
      %s487 = smul.u32 4, %s26
      %p488 = scmp.lt.s32.totalorder %s25, 1
      %s489 = scalar_select %p488, %s25, 1
      %p490 = scmp.lt.s32.totalorder %s487, 7
      %s491 = scalar_select %p490, %s487, 7
      %s492 = smul.addr %s489, 8
      %s493 = sadd.s32 %s491, %s492
      %s494 = smul.addr %s493, 4
      %s495 = scalar_lea.vmem %s0, %s494
      %s496 = smul.u32 4, %s26
      %s497 = sadd.s32 %s26, 1
      %s498 = smul.u32 %s497, 4
      %p499 = scmp.lt.s32.totalorder %s498, 7
      %s500 = scalar_select %p499, %s498, 7
      %p501 = scmp.lt.s32.totalorder %s25, 1
      %s502 = scalar_select %p501, %s25, 1
      %p503 = scmp.lt.s32.totalorder %s500, 7
      %s504 = scalar_select %p503, %s500, 7
      %s505 = smul.addr %s502, 8
      %s506 = sadd.s32 %s504, %s505
      %s507 = smul.addr %s506, 4
      %s508 = scalar_lea.vmem %s1, %s507
      %s509 = sadd.s32 %s26, 1
      %s510 = smul.u32 %s509, 4
      %p511 = scmp.lt.s32.totalorder %s510, 7
      %s512 = scalar_select %p511, %s510, 7
      %s513 = smul.u32 4, %s26
      %p514 = scmp.lt.s32.totalorder %s25, 1
      %s515 = scalar_select %p514, %s25, 1
      %p516 = scmp.lt.s32.totalorder %s513, 7
      %s517 = scalar_select %p516, %s513, 7
      %s518 = smul.addr %s515, 8
      %s519 = sadd.s32 %s517, %s518
      %s520 = smul.addr %s519, 4
      %s521 = scalar_lea.vmem %s2, %s520
      %s522 = smul.u32 4, %s26
      %s523 = sadd.s32 %s26, 1
      %s524 = smul.u32 %s523, 4
      %p525 = scmp.lt.s32.totalorder %s524, 7
      %s526 = scalar_select %p525, %s524, 7
      %p527 = scmp.lt.s32.totalorder %s25, 1
      %s528 = scalar_select %p527, %s25, 1
      %p529 = scmp.lt.s32.totalorder %s526, 7
      %s530 = scalar_select %p529, %s526, 7
      %s531 = smul.addr %s528, 8
      %s532 = sadd.s32 %s530, %s531
      %s533 = smul.addr %s532, 4
      %s534 = scalar_lea.vmem %s3, %s533
      %s535 = sadd.s32 %s26, 1
      %s536 = smul.u32 %s535, 4
      %p537 = scmp.lt.s32.totalorder %s536, 7
      %s538 = scalar_select %p537, %s536, 7
      %s539 = smul.u32 4, %s26
      %p540 = scmp.lt.s32.totalorder %s25, 1
      %s541 = scalar_select %p540, %s25, 1
      %p542 = scmp.lt.s32.totalorder %s539, 7
      %s543 = scalar_select %p542, %s539, 7
      %s544 = smul.addr %s541, 8
      %s545 = sadd.s32 %s543, %s544
      %s546 = smul.addr %s545, 4
      %s547 = scalar_lea.vmem %s7, %s546
      %s548 = smul.u32 4, %s26
      %p549 = scmp.lt.s32.totalorder %s25, 1
      %s550 = scalar_select %p549, %s25, 1
      %p551 = scmp.lt.s32.totalorder %s26, 1
      %s552 = scalar_select %p551, %s26, 1
      %s553 = smul.addr %s550, 2
      %s554 = sadd.s32 %s552, %s553
      %s555 = scalar_lea.vmem %s8, %s554
      %p556 = scmp.lt.s32.totalorder %s25, 1
      %s557 = scalar_select %p556, %s25, 1
      %p558 = scmp.lt.s32.totalorder %s26, 1
      %s559 = scalar_select %p558, %s26, 1
      %s560 = smul.addr %s557, 2
      %s561 = sadd.s32 %s559, %s560
      %s562 = scalar_lea.vmem %s9, %s561
      %p564 = scmp.eq.s32.totalorder %s26, 0
      // Predicated region
      $region49: #{conv_module_forward.2} parent=47 // pred_check
        %p565 = pneg %p564
      $region50: #{conv_module_forward.2} parent=47 // pred_check_branch
        %567 = sbr.rel (%p565) target = $region52
      $region51: #{conv_module_forward.2} parent=47 // pred_region
        %568 = vst [vmem:[#allocation3] sm:$0xff] 0.0
      $region52: #{conv_module_forward.2} parent=47 // pred_fallthru
        _
      %s569 = smul.u32 %s26, 32
      %v570 = vlaneseq
      %v571 = vshrl.u32 %v570, 7
      %v572 = vadd.s32 %v571, 8
      %v573 = vadd.s32 %v571, 16
      %v574 = vadd.s32 %v571, 24
      %v575 = vstv %s569
      %v576 = vadd.s32 %v575, %v571
      %v577 = vadd.s32 %v575, %v572
      %v578 = vadd.s32 %v575, %v573
      %v579 = vadd.s32 %v575, %v574
      %vm580 = vcmp.lt.s32.totalorder %v576, 44
      %vm581 = vcmp.lt.s32.totalorder %v577, 44
      %vm582 = vcmp.lt.s32.totalorder %v578, 44
      %vm583 = vcmp.lt.s32.totalorder %v579, 44
      %v584 = vsel %vm580, 1, 0
      %v585 = vsel %vm581, 1, 0
      %v586 = vsel %vm582, 1, 0
      %v587 = vsel %vm583, 1, 0
      %v588 = vcvt.s32.f32 %v584
      %v589 = vcvt.s32.f32 %v585
      %v590 = vcvt.s32.f32 %v586
      %v591 = vcvt.s32.f32 %v587
      %v592 = vld [vmem:[%s495] sm:$0xf]
      %v593 = vld [vmem:[%s495 + $0x4] sm:$0xf]
      %v594 = vld [vmem:[%s495 + $0x8] sm:$0xf]
      %v595 = vld [vmem:[%s495 + $0xc] sm:$0xf]
      %v596 = vld [vmem:[%s521] sm:$0xf]
      %v597 = vld [vmem:[%s521 + $0x4] sm:$0xf]
      %v598 = vld [vmem:[%s521 + $0x8] sm:$0xf]
      %v599 = vld [vmem:[%s521 + $0xc] sm:$0xf]
      %601 = vset.pattern.permute.xlu0 0
      %602 = vperm.xlu0 %601, %v596
      %v603 = vpop.permute.xlu0 %602
      %v606 = vunpack.c.l.s4 839922192
      %v607 = vunpack.c.0.s8 %v606
      %v608 = vlaneseq
      %v609 = vshrl.u32 %v608, 7
      %v610 = vsub.s32 %v607, %v609
      %v611 = vrot.slane %v603, %v610
      %613 = vset.pattern.permute.xlu0 0
      %614 = vperm.xlu0 %613, %v597
      %v615 = vpop.permute.xlu0 %614
      %v618 = vunpack.c.l.s4 839922192
      %v619 = vunpack.c.0.s8 %v618
      %v620 = vlaneseq
      %v621 = vshrl.u32 %v620, 7
      %v622 = vsub.s32 %v619, %v621
      %v623 = vrot.slane %v615, %v622
      %625 = vset.pattern.permute.xlu0 0
      %626 = vperm.xlu0 %625, %v598
      %v627 = vpop.permute.xlu0 %626
      %v630 = vunpack.c.l.s4 839922192
      %v631 = vunpack.c.0.s8 %v630
      %v632 = vlaneseq
      %v633 = vshrl.u32 %v632, 7
      %v634 = vsub.s32 %v631, %v633
      %v635 = vrot.slane %v627, %v634
      %637 = vset.pattern.permute.xlu0 0
      %638 = vperm.xlu0 %637, %v599
      %v639 = vpop.permute.xlu0 %638
      %v642 = vunpack.c.l.s4 839922192
      %v643 = vunpack.c.0.s8 %v642
      %v644 = vlaneseq
      %v645 = vshrl.u32 %v644, 7
      %v646 = vsub.s32 %v643, %v645
      %v647 = vrot.slane %v639, %v646
      %v648 = vmul.bf16 %v592, %v611
      %v649 = vmul.bf16 %v593, %v623
      %v650 = vmul.bf16 %v594, %v635
      %v651 = vmul.bf16 %v595, %v647
      %v652 = vld [vmem:[%s4] sm:$0xff]
      %v653 = vld [vmem:[%s4 + $0x8] sm:$0xff]
      %v654 = vld [vmem:[%s4 + $0x10] sm:$0xff]
      %v655 = vld [vmem:[%s4 + $0x18] sm:$0xff]
      %v656 = vld [vmem:[%s4 + $0x20] sm:$0xff]
      %v657 = vld [vmem:[%s4 + $0x28] sm:$0xff]
      %v658 = vld [vmem:[%s4 + $0x30] sm:$0xff]
      %v659 = vld [vmem:[%s4 + $0x38] sm:$0xff]
      %v660 = vld [vmem:[%s4 + $0x40] sm:$0xff]
      %v661 = vld [vmem:[%s4 + $0x48] sm:$0xff]
      %v662 = vld [vmem:[%s4 + $0x50] sm:$0xff]
      %v663 = vld [vmem:[%s4 + $0x58] sm:$0xff]
      %v664 = vld [vmem:[%s4 + $0x60] sm:$0xff]
      %v665 = vld [vmem:[%s4 + $0x68] sm:$0xff]
      %v666 = vld [vmem:[%s4 + $0x70] sm:$0xff]
      %v667 = vld [vmem:[%s4 + $0x78] sm:$0xff]
      %v668 = vld [vmem:[%s5] sm:$0x3]
      %v670 = vlaneseq
      %v671 = vshrl.u32 %v670, 7
      %v672 = vsub.s32 0, %v671
      %v673 = vrot.slane %v668, %v672
      %v674 = vlaneseq
      %v675 = vshrl.u32 %v674, 7
      %v676 = vsub.s32 1, %v675
      %v677 = vrot.slane %v668, %v676
      %v684 = vunpack.c.l.b16 %v648
      %v685 = vunpack.c.l.b16 %v649
      %v686 = vunpack.c.l.b16 %v650
      %v687 = vunpack.c.l.b16 %v651
      %v688 = vpack.c.b16 %v685, %v684
      %v689 = vpack.c.b16 %v687, %v686
      %v708 = vunpack.c.l.b16 %v652
      %v709 = vunpack.c.h.b16 %v652
      %v710 = vunpack.c.l.b16 %v653
      %v711 = vunpack.c.h.b16 %v653
      %v712 = vunpack.c.l.b16 %v654
      %v713 = vunpack.c.h.b16 %v654
      %v714 = vunpack.c.l.b16 %v655
      %v715 = vunpack.c.h.b16 %v655
      %v716 = vunpack.c.l.b16 %v656
      %v717 = vunpack.c.h.b16 %v656
      %v718 = vunpack.c.l.b16 %v657
      %v719 = vunpack.c.h.b16 %v657
      %v720 = vunpack.c.l.b16 %v658
      %v721 = vunpack.c.h.b16 %v658
      %v722 = vunpack.c.l.b16 %v659
      %v723 = vunpack.c.h.b16 %v659
      %v724 = vunpack.c.l.b16 %v660
      %v725 = vunpack.c.h.b16 %v660
      %v726 = vunpack.c.l.b16 %v661
      %v727 = vunpack.c.h.b16 %v661
      %v728 = vunpack.c.l.b16 %v662
      %v729 = vunpack.c.h.b16 %v662
      %v730 = vunpack.c.l.b16 %v663
      %v731 = vunpack.c.h.b16 %v663
      %v732 = vunpack.c.l.b16 %v664
      %v733 = vunpack.c.h.b16 %v664
      %v734 = vunpack.c.l.b16 %v665
      %v735 = vunpack.c.h.b16 %v665
      %v736 = vunpack.c.l.b16 %v666
      %v737 = vunpack.c.h.b16 %v666
      %v738 = vunpack.c.l.b16 %v667
      %v739 = vunpack.c.h.b16 %v667
      %v740 = vpack.c.b16 %v710, %v708
      %v741 = vpack.c.b16 %v711, %v709
      %v742 = vpack.c.b16 %v714, %v712
      %v743 = vpack.c.b16 %v715, %v713
      %v744 = vpack.c.b16 %v718, %v716
      %v745 = vpack.c.b16 %v719, %v717
      %v746 = vpack.c.b16 %v722, %v720
      %v747 = vpack.c.b16 %v723, %v721
      %v748 = vpack.c.b16 %v726, %v724
      %v749 = vpack.c.b16 %v727, %v725
      %v750 = vpack.c.b16 %v730, %v728
      %v751 = vpack.c.b16 %v731, %v729
      %v752 = vpack.c.b16 %v734, %v732
      %v753 = vpack.c.b16 %v735, %v733
      %v754 = vpack.c.b16 %v738, %v736
      %v755 = vpack.c.b16 %v739, %v737
      %772 = vmatprep.subr.bf16.mxu0 %v741
      %773 = vmatpush1.bf16.msra.mxu0 %v740
      %774 = vmatprep.subr.bf16.mxu0 %v743
      %775 = vmatpush1.bf16.msra.mxu0 %v742
      %776 = vmatprep.subr.bf16.mxu0 %v745
      %777 = vmatpush1.bf16.msra.mxu0 %v744
      %778 = vmatprep.subr.bf16.mxu0 %v747
      %779 = vmatpush1.bf16.msra.mxu0 %v746
      %780 = vmatprep.subr.bf16.mxu0 %v749
      %781 = vmatpush1.bf16.msra.mxu0 %v748
      %782 = vmatprep.subr.bf16.mxu0 %v751
      %783 = vmatpush1.bf16.msra.mxu0 %v750
      %784 = vmatprep.subr.bf16.mxu0 %v753
      %785 = vmatpush1.bf16.msra.mxu0 %v752
      %786 = vmatprep.subr.bf16.mxu0 %v755
      %787 = vmatpush1.bf16.msra.mxu0 %v754
      %788 = vmatprep.subr.bf16.mxu0 0
      %789 = vmatpush1.bf16.msra.mxu0 0
      %790 = vmatprep.subr.bf16.mxu0 0
      %791 = vmatpush1.bf16.msra.mxu0 0
      %792 = vmatprep.subr.bf16.mxu0 0
      %793 = vmatpush1.bf16.msra.mxu0 0
      %794 = vmatprep.subr.bf16.mxu0 0
      %795 = vmatpush1.bf16.msra.mxu0 0
      %796 = vmatprep.subr.bf16.mxu0 0
      %797 = vmatpush1.bf16.msra.mxu0 0
      %798 = vmatprep.subr.bf16.mxu0 0
      %799 = vmatpush1.bf16.msra.mxu0 0
      %800 = vmatprep.subr.bf16.mxu0 0
      %801 = vmatpush1.bf16.msra.mxu0 0
      %802 = vmatprep.subr.bf16.mxu0 0
      %803 = vmatpush1.bf16.msra.mxu0 0
      %804 = vmatprep.mubr.bf16.mxu0 0
      %805 = vmatmul.mubr.bf16.gmra.mrb[0].mxu0 %v688
      %v806 = vpop.f32.mrb[0].mxu0
      %v807 = vadd.f32 %v673, %v806
      %v808 = vpop.f32.mrb[0].mxu0
      %v809 = vadd.f32 %v677, %v808
      %v810 = vpop.f32.mrb[0].mxu0
      %v811 = vadd.f32 %v673, %v810
      %v812 = vpop.f32.mrb[0].mxu0
      %v813 = vadd.f32 %v677, %v812
      %814 = vmatprep.mubr.bf16.mxu0 0
      %815 = vmatmul.mubr.bf16.gmra.mrb[0].mxu0 %v689
      %v816 = vpop.f32.mrb[0].mxu0
      %v817 = vadd.f32 %v673, %v816
      %v818 = vpop.f32.mrb[0].mxu0
      %v819 = vadd.f32 %v677, %v818
      %v820 = vpop.f32.mrb[0].mxu0
      %v821 = vadd.f32 %v673, %v820
      %v822 = vpop.f32.mrb[0].mxu0
      %v823 = vadd.f32 %v677, %v822
      %824 = vdwg.mxu0
      %v825 = vxor.u32 %v809, 2147483648
      %v826 = vxor.u32 %v813, 2147483648
      %v827 = vxor.u32 %v819, 2147483648
      %v828 = vxor.u32 %v823, 2147483648
      %v829 = vmul.f32 %v825, 1.442695
      %v830 = vpow.pop %v829
      %v831 = vmul.f32 %v826, 1.442695
      %v832 = vpow.pop %v831
      %v833 = vmul.f32 %v827, 1.442695
      %v834 = vpow.pop %v833
      %v835 = vmul.f32 %v828, 1.442695
      %v836 = vpow.pop %v835
      %v837 = vadd.f32 %v830, 1.0
      %v838 = vadd.f32 %v832, 1.0
      %v839 = vadd.f32 %v834, 1.0
      %v840 = vadd.f32 %v836, 1.0
      %v841 = vrcp.pop %v837
      %v842 = vmul.f32 1.0, %v841
      %v843 = vrcp.pop %v838
      %v844 = vmul.f32 1.0, %v843
      %v845 = vrcp.pop %v839
      %v846 = vmul.f32 1.0, %v845
      %v847 = vrcp.pop %v840
      %v848 = vmul.f32 1.0, %v847
      %v849 = vmul.f32 %v807, %v842
      %v850 = vmul.f32 %v811, %v844
      %v851 = vmul.f32 %v817, %v846
      %v852 = vmul.f32 %v821, %v848
      %v853 = vmul.f32 %v849, %v588
      %v854 = vmul.f32 %v850, %v589
      %v855 = vmul.f32 %v851, %v590
      %v856 = vmul.f32 %v852, %v591
      %v857 = vld [vmem:[%s508] sm:$0xf]
      %v858 = vld [vmem:[%s534] sm:$0xf]
      %860 = vset.pattern.permute.xlu0 0
      %861 = vperm.xlu0 %860, %v858
      %v862 = vpop.permute.xlu0 %861
      %v865 = vunpack.c.l.s4 839922192
      %v866 = vunpack.c.0.s8 %v865
      %v867 = vlaneseq
      %v868 = vshrl.u32 %v867, 7
      %v869 = vsub.s32 %v866, %v868
      %v870 = vrot.slane %v862, %v869
      %v871 = vmul.bf16 %v857, %v870
      %872 = vmatprep.subr.bf16.mxu0 %v741
      %873 = vmatpush1.bf16.msra.mxu0 %v740
      %874 = vmatprep.subr.bf16.mxu0 %v743
      %875 = vmatpush1.bf16.msra.mxu0 %v742
      %876 = vmatprep.subr.bf16.mxu0 %v745
      %877 = vmatpush1.bf16.msra.mxu0 %v744
      %878 = vmatprep.subr.bf16.mxu0 %v747
      %879 = vmatpush1.bf16.msra.mxu0 %v746
      %880 = vmatprep.subr.bf16.mxu0 %v749
      %881 = vmatpush1.bf16.msra.mxu0 %v748
      %882 = vmatprep.subr.bf16.mxu0 %v751
      %883 = vmatpush1.bf16.msra.mxu0 %v750
      %884 = vmatprep.subr.bf16.mxu0 %v753
      %885 = vmatpush1.bf16.msra.mxu0 %v752
      %886 = vmatprep.subr.bf16.mxu0 %v755
      %887 = vmatpush1.bf16.msra.mxu0 %v754
      %888 = vmatprep.subr.bf16.mxu0 0
      %889 = vmatpush1.bf16.msra.mxu0 0
      %890 = vmatprep.subr.bf16.mxu0 0
      %891 = vmatpush1.bf16.msra.mxu0 0
      %892 = vmatprep.subr.bf16.mxu0 0
      %893 = vmatpush1.bf16.msra.mxu0 0
      %894 = vmatprep.subr.bf16.mxu0 0
      %895 = vmatpush1.bf16.msra.mxu0 0
      %896 = vmatprep.subr.bf16.mxu0 0
      %897 = vmatpush1.bf16.msra.mxu0 0
      %898 = vmatprep.subr.bf16.mxu0 0
      %899 = vmatpush1.bf16.msra.mxu0 0
      %900 = vmatprep.subr.bf16.mxu0 0
      %901 = vmatpush1.bf16.msra.mxu0 0
      %902 = vmatprep.subr.bf16.mxu0 0
      %903 = vmatpush1.bf16.msra.mxu0 0
      %904 = vmatprep.mubr.bf16.mxu0 0
      %905 = vmatmul.mubr.bf16.gmra.mrb[0].mxu0 %v871
      %v906 = vpop.f32.mrb[0].mxu0
      %v907 = vadd.f32 %v673, %v906
      %v908 = vpop.f32.mrb[0].mxu0
      %v909 = vadd.f32 %v677, %v908
      %v910 = vpop.f32.mrb[0].mxu0
      %v911 = vpop.f32.mrb[0].mxu0
      %912 = vdwg.mxu0
      %v913 = vxor.u32 %v909, 2147483648
      %v914 = vmul.f32 %v913, 1.442695
      %v915 = vpow.pop %v914
      %v916 = vadd.f32 %v915, 1.0
      %v917 = vrcp.pop %v916
      %v918 = vmul.f32 1.0, %v917
      %v919 = vmul.f32 %v907, %v918
      %s920 = sadd.s32 %s26, 1
      %s921 = smul.u32 %s920, 32
      %v922 = vstv %s921
      %v923 = vadd.s32 %v922, %v571
      %vm924 = vcmp.lt.s32.totalorder %v923, 44
      %v925 = vsel %vm924, 1, 0
      %v926 = vcvt.s32.f32 %v925
      %v927 = vmul.f32 %v919, %v926
      %v928 = vld [vmem:[#allocation3] sm:$0xff]
      %929 = vst [vmem:[#allocation2] sm:$0xff] %v928
      %930 = vst [vmem:[#allocation2 + $0x8] sm:$0xff] %v853
      %931 = vst [vmem:[#allocation2 + $0x10] sm:$0xff] %v854
      %932 = vst [vmem:[#allocation2 + $0x18] sm:$0xff] %v855
      %933 = vst [vmem:[#allocation2 + $0x20] sm:$0xff] %v856
      %934 = vst [vmem:[#allocation2 + $0x28] sm:$0xff] %v927
      %935 = vst [vmem:[#allocation3] sm:$0xff] %v856
      %v936 = vld [vmem:[%s6] sm:$0xff]
      %v937 = vld [vmem:[%s6 + $0x8] sm:$0x7f]
      %v938 = vld [vmem:[#allocation2 + $0x1] sm:$0xff]
      %v939 = vld [vmem:[#allocation2 + $0x9] sm:$0xff]
      %v940 = vld [vmem:[#allocation2 + $0x11] sm:$0xff]
      %v941 = vld [vmem:[#allocation2 + $0x19] sm:$0xff]
      %v942 = vlaneseq
      %v943 = vshrl.u32 %v942, 7
      %v944 = vsub.s32 0, %v943
      %v945 = vrot.slane %v936, %v944
      %v946 = vmul.f32 %v938, %v945
      %v947 = vmul.f32 %v939, %v945
      %v948 = vmul.f32 %v940, %v945
      %v949 = vmul.f32 %v941, %v945
      %v950 = vld [vmem:[#allocation2 + $0x2] sm:$0xff]
      %v951 = vld [vmem:[#allocation2 + $0xa] sm:$0xff]
      %v952 = vld [vmem:[#allocation2 + $0x12] sm:$0xff]
      %v953 = vld [vmem:[#allocation2 + $0x1a] sm:$0xff]
      %v954 = vlaneseq
      %v955 = vshrl.u32 %v954, 7
      %v956 = vsub.s32 1, %v955
      %v957 = vrot.slane %v936, %v956
      %v958 = vmul.f32 %v950, %v957
      %v959 = vmul.f32 %v951, %v957
      %v960 = vmul.f32 %v952, %v957
      %v961 = vmul.f32 %v953, %v957
      %v962 = vld [vmem:[#allocation2 + $0x3] sm:$0xff]
      %v963 = vld [vmem:[#allocation2 + $0xb] sm:$0xff]
      %v964 = vld [vmem:[#allocation2 + $0x13] sm:$0xff]
      %v965 = vld [vmem:[#allocation2 + $0x1b] sm:$0xff]
      %v966 = vlaneseq
      %v967 = vshrl.u32 %v966, 7
      %v968 = vsub.s32 2, %v967
      %v969 = vrot.slane %v936, %v968
      %v970 = vmul.f32 %v962, %v969
      %v971 = vmul.f32 %v963, %v969
      %v972 = vmul.f32 %v964, %v969
      %v973 = vmul.f32 %v965, %v969
      %v974 = vadd.f32 %v946, %v970
      %v975 = vadd.f32 %v947, %v971
      %v976 = vadd.f32 %v948, %v972
      %v977 = vadd.f32 %v949, %v973
      %v978 = vld [vmem:[#allocation2 + $0x4] sm:$0xff]
      %v979 = vld [vmem:[#allocation2 + $0xc] sm:$0xff]
      %v980 = vld [vmem:[#allocation2 + $0x14] sm:$0xff]
      %v981 = vld [vmem:[#allocation2 + $0x1c] sm:$0xff]
      %v982 = vlaneseq
      %v983 = vshrl.u32 %v982, 7
      %v984 = vsub.s32 3, %v983
      %v985 = vrot.slane %v936, %v984
      %v986 = vmul.f32 %v978, %v985
      %v987 = vmul.f32 %v979, %v985
      %v988 = vmul.f32 %v980, %v985
      %v989 = vmul.f32 %v981, %v985
      %v990 = vadd.f32 %v958, %v986
      %v991 = vadd.f32 %v959, %v987
      %v992 = vadd.f32 %v960, %v988
      %v993 = vadd.f32 %v961, %v989
      %v994 = vld [vmem:[#allocation2 + $0x5] sm:$0xff]
      %v995 = vld [vmem:[#allocation2 + $0xd] sm:$0xff]
      %v996 = vld [vmem:[#allocation2 + $0x15] sm:$0xff]
      %v997 = vld [vmem:[#allocation2 + $0x1d] sm:$0xff]
      %v998 = vlaneseq
      %v999 = vshrl.u32 %v998, 7
      %v1000 = vsub.s32 4, %v999
      %v1001 = vrot.slane %v936, %v1000
      %v1002 = vmul.f32 %v994, %v1001
      %v1003 = vmul.f32 %v995, %v1001
      %v1004 = vmul.f32 %v996, %v1001
      %v1005 = vmul.f32 %v997, %v1001
      %v1006 = vadd.f32 %v974, %v1002
      %v1007 = vadd.f32 %v975, %v1003
      %v1008 = vadd.f32 %v976, %v1004
      %v1009 = vadd.f32 %v977, %v1005
      %v1010 = vld [vmem:[#allocation2 + $0x6] sm:$0xff]
      %v1011 = vld [vmem:[#allocation2 + $0xe] sm:$0xff]
      %v1012 = vld [vmem:[#allocation2 + $0x16] sm:$0xff]
      %v1013 = vld [vmem:[#allocation2 + $0x1e] sm:$0xff]
      %v1014 = vlaneseq
      %v1015 = vshrl.u32 %v1014, 7
      %v1016 = vsub.s32 5, %v1015
      %v1017 = vrot.slane %v936, %v1016
      %v1018 = vmul.f32 %v1010, %v1017
      %v1019 = vmul.f32 %v1011, %v1017
      %v1020 = vmul.f32 %v1012, %v1017
      %v1021 = vmul.f32 %v1013, %v1017
      %v1022 = vadd.f32 %v990, %v1018
      %v1023 = vadd.f32 %v991, %v1019
      %v1024 = vadd.f32 %v992, %v1020
      %v1025 = vadd.f32 %v993, %v1021
      %v1026 = vld [vmem:[#allocation2 + $0x7] sm:$0xff]
      %v1027 = vld [vmem:[#allocation2 + $0xf] sm:$0xff]
      %v1028 = vld [vmem:[#allocation2 + $0x17] sm:$0xff]
      %v1029 = vld [vmem:[#allocation2 + $0x1f] sm:$0xff]
      %v1030 = vlaneseq
      %v1031 = vshrl.u32 %v1030, 7
      %v1032 = vsub.s32 6, %v1031
      %v1033 = vrot.slane %v936, %v1032
      %v1034 = vmul.f32 %v1026, %v1033
      %v1035 = vmul.f32 %v1027, %v1033
      %v1036 = vmul.f32 %v1028, %v1033
      %v1037 = vmul.f32 %v1029, %v1033
      %v1038 = vadd.f32 %v1006, %v1034
      %v1039 = vadd.f32 %v1007, %v1035
      %v1040 = vadd.f32 %v1008, %v1036
      %v1041 = vadd.f32 %v1009, %v1037
      %v1042 = vld [vmem:[#allocation2 + $0x8] sm:$0xff]
      %v1043 = vld [vmem:[#allocation2 + $0x10] sm:$0xff]
      %v1044 = vld [vmem:[#allocation2 + $0x18] sm:$0xff]
      %v1045 = vld [vmem:[#allocation2 + $0x20] sm:$0xff]
      %v1046 = vlaneseq
      %v1047 = vshrl.u32 %v1046, 7
      %v1048 = vsub.s32 7, %v1047
      %v1049 = vrot.slane %v936, %v1048
      %v1050 = vmul.f32 %v1042, %v1049
      %v1051 = vmul.f32 %v1043, %v1049
      %v1052 = vmul.f32 %v1044, %v1049
      %v1053 = vmul.f32 %v1045, %v1049
      %v1054 = vadd.f32 %v1022, %v1050
      %v1055 = vadd.f32 %v1023, %v1051
      %v1056 = vadd.f32 %v1024, %v1052
      %v1057 = vadd.f32 %v1025, %v1053
      %v1058 = vld [vmem:[#allocation2 + $0x21] sm:$0xff]
      %v1059 = vlaneseq
      %v1060 = vshrl.u32 %v1059, 7
      %v1061 = vsub.s32 0, %v1060
      %v1062 = vrot.slane %v937, %v1061
      %v1063 = vmul.f32 %v939, %v1062
      %v1064 = vmul.f32 %v940, %v1062
      %v1065 = vmul.f32 %v941, %v1062
      %v1066 = vmul.f32 %v1058, %v1062
      %v1067 = vadd.f32 %v1038, %v1063
      %v1068 = vadd.f32 %v1039, %v1064
      %v1069 = vadd.f32 %v1040, %v1065
      %v1070 = vadd.f32 %v1041, %v1066
      %v1071 = vld [vmem:[#allocation2 + $0x22] sm:$0xff]
      %v1072 = vlaneseq
      %v1073 = vshrl.u32 %v1072, 7
      %v1074 = vsub.s32 1, %v1073
      %v1075 = vrot.slane %v937, %v1074
      %v1076 = vmul.f32 %v951, %v1075
      %v1077 = vmul.f32 %v952, %v1075
      %v1078 = vmul.f32 %v953, %v1075
      %v1079 = vmul.f32 %v1071, %v1075
      %v1080 = vadd.f32 %v1054, %v1076
      %v1081 = vadd.f32 %v1055, %v1077
      %v1082 = vadd.f32 %v1056, %v1078
      %v1083 = vadd.f32 %v1057, %v1079
      %v1084 = vld [vmem:[#allocation2 + $0x23] sm:$0xff]
      %v1085 = vlaneseq
      %v1086 = vshrl.u32 %v1085, 7
      %v1087 = vsub.s32 2, %v1086
      %v1088 = vrot.slane %v937, %v1087
      %v1089 = vmul.f32 %v963, %v1088
      %v1090 = vmul.f32 %v964, %v1088
      %v1091 = vmul.f32 %v965, %v1088
      %v1092 = vmul.f32 %v1084, %v1088
      %v1093 = vadd.f32 %v1067, %v1089
      %v1094 = vadd.f32 %v1068, %v1090
      %v1095 = vadd.f32 %v1069, %v1091
      %v1096 = vadd.f32 %v1070, %v1092
      %v1097 = vld [vmem:[#allocation2 + $0x24] sm:$0xff]
      %v1098 = vlaneseq
      %v1099 = vshrl.u32 %v1098, 7
      %v1100 = vsub.s32 3, %v1099
      %v1101 = vrot.slane %v937, %v1100
      %v1102 = vmul.f32 %v979, %v1101
      %v1103 = vmul.f32 %v980, %v1101
      %v1104 = vmul.f32 %v981, %v1101
      %v1105 = vmul.f32 %v1097, %v1101
      %v1106 = vadd.f32 %v1080, %v1102
      %v1107 = vadd.f32 %v1081, %v1103
      %v1108 = vadd.f32 %v1082, %v1104
      %v1109 = vadd.f32 %v1083, %v1105
      %v1110 = vld [vmem:[#allocation2 + $0x25] sm:$0xff]
      %v1111 = vlaneseq
      %v1112 = vshrl.u32 %v1111, 7
      %v1113 = vsub.s32 4, %v1112
      %v1114 = vrot.slane %v937, %v1113
      %v1115 = vmul.f32 %v995, %v1114
      %v1116 = vmul.f32 %v996, %v1114
      %v1117 = vmul.f32 %v997, %v1114
      %v1118 = vmul.f32 %v1110, %v1114
      %v1119 = vadd.f32 %v1093, %v1115
      %v1120 = vadd.f32 %v1094, %v1116
      %v1121 = vadd.f32 %v1095, %v1117
      %v1122 = vadd.f32 %v1096, %v1118
      %v1123 = vld [vmem:[#allocation2 + $0x26] sm:$0xff]
      %v1124 = vlaneseq
      %v1125 = vshrl.u32 %v1124, 7
      %v1126 = vsub.s32 5, %v1125
      %v1127 = vrot.slane %v937, %v1126
      %v1128 = vmul.f32 %v1011, %v1127
      %v1129 = vmul.f32 %v1012, %v1127
      %v1130 = vmul.f32 %v1013, %v1127
      %v1131 = vmul.f32 %v1123, %v1127
      %v1132 = vadd.f32 %v1106, %v1128
      %v1133 = vadd.f32 %v1107, %v1129
      %v1134 = vadd.f32 %v1108, %v1130
      %v1135 = vadd.f32 %v1109, %v1131
      %v1136 = vld [vmem:[#allocation2 + $0x27] sm:$0xff]
      %v1137 = vlaneseq
      %v1138 = vshrl.u32 %v1137, 7
      %v1139 = vsub.s32 6, %v1138
      %v1140 = vrot.slane %v937, %v1139
      %v1141 = vmul.f32 %v1027, %v1140
      %v1142 = vmul.f32 %v1028, %v1140
      %v1143 = vmul.f32 %v1029, %v1140
      %v1144 = vmul.f32 %v1136, %v1140
      %v1145 = vadd.f32 %v1119, %v1141
      %v1146 = vadd.f32 %v1120, %v1142
      %v1147 = vadd.f32 %v1121, %v1143
      %v1148 = vadd.f32 %v1122, %v1144
      %v1149 = vadd.f32 %v1145, %v1132
      %v1150 = vadd.f32 %v1146, %v1133
      %v1151 = vadd.f32 %v1147, %v1134
      %v1152 = vadd.f32 %v1148, %v1135
      %v1153 = vpack.c.bf16 %v1150, %v1149
      %v1154 = vpack.c.bf16 %v1152, %v1151
      %v1157 = vunpack.c.l.b16 %v1153
      %v1158 = vunpack.c.h.b16 %v1153
      %v1159 = vunpack.c.l.b16 %v1154
      %v1160 = vunpack.c.h.b16 %v1154
      %v1161 = vpack.c.b16 %v1157, %v1157
      %v1162 = vpack.c.b16 %v1158, %v1158
      %v1163 = vpack.c.b16 %v1159, %v1159
      %v1164 = vpack.c.b16 %v1160, %v1160
      %1169 = vst [vmem:[%s547] sm:$0xf] %v1161
      %1170 = vst [vmem:[%s547 + $0x4] sm:$0xf] %v1162
      %1171 = vst [vmem:[%s547 + $0x8] sm:$0xf] %v1163
      %1172 = vst [vmem:[%s547 + $0xc] sm:$0xf] %v1164
      %v1173 = vmul.f32 %v1149, %v588
      %v1174 = vmul.f32 %v1150, %v589
      %v1175 = vmul.f32 %v1151, %v590
      %v1176 = vmul.f32 %v1152, %v591
      %v1177 = vadd.f32 %v1173, %v1174
      %v1178 = vadd.f32 %v1177, %v1175
      %v1179 = vadd.f32 %v1178, %v1176
      %v1180 = vrot.slane %v1179, 4
      %v1181 = vadd.f32 %v1179, %v1180
      %v1182 = vrot.slane %v1181, 2
      %v1183 = vadd.f32 %v1181, %v1182
      %v1184 = vrot.slane %v1183, 1
      %v1185 = vadd.f32 %v1183, %v1184
      %vm1186 = vcmask 7168
      %v1187 = vsel %vm1186, %v588, 0.0
      %v1188 = vsel %vm1186, %v589, 0.0
      %v1189 = vadd.f32 %v1187, %v1188
      %v1190 = vsel %vm1186, %v590, 0.0
      %v1191 = vadd.f32 %v1189, %v1190
      %v1192 = vsel %vm1186, %v591, 0.0
      %v1193 = vadd.f32 %v1191, %v1192
      %1194 = vadd.xlane.f32.xlu0 %v1193
      %v1195 = vpop.xlane.xlu0 %1194
      %v1196 = vrot.slane %v1195, 4
      %v1197 = vadd.f32 %v1195, %v1196
      %v1198 = vrot.slane %v1197, 2
      %v1199 = vadd.f32 %v1197, %v1198
      %v1200 = vrot.slane %v1199, 1
      %v1201 = vadd.f32 %v1199, %v1200
      %s1202 = vtos %v1201
      %s1203 = smax.f32 %s1202, 1.0
      %v1204 = vstv %s1203
      %v1205 = vrcp.pop %v1204
      %v1206 = vmul.f32 %v1185, %v1205
      %v1207 = vsub.f32 %v1149, %v1206
      %v1208 = vsub.f32 %v1150, %v1206
      %v1209 = vsub.f32 %v1151, %v1206
      %v1210 = vsub.f32 %v1152, %v1206
      %v1211 = vmul.f32 %v1207, %v588
      %v1212 = vmul.f32 %v1208, %v589
      %v1213 = vmul.f32 %v1209, %v590
      %v1214 = vmul.f32 %v1210, %v591
      %v1215 = vmul.f32 %v1211, %v1211
      %v1216 = vmul.f32 %v1212, %v1212
      %v1217 = vmul.f32 %v1213, %v1213
      %v1218 = vmul.f32 %v1214, %v1214
      %v1219 = vadd.f32 %v1215, %v1216
      %v1220 = vadd.f32 %v1219, %v1217
      %v1221 = vadd.f32 %v1220, %v1218
      %v1222 = vrot.slane %v1221, 4
      %v1223 = vadd.f32 %v1221, %v1222
      %v1224 = vrot.slane %v1223, 2
      %v1225 = vadd.f32 %v1223, %v1224
      %v1226 = vrot.slane %v1225, 1
      %v1227 = vadd.f32 %v1225, %v1226
      %1228 = vst [vmem:[%s555] sm:$0x1] %v1185
      %1229 = vst [vmem:[%s562] sm:$0x1] %v1227
      %s1230 = smul.u32 4, %s26
      %p1231 = scmp.lt.s32.totalorder %s25, 1
      %s1232 = scalar_select %p1231, %s25, 1
      %p1233 = scmp.lt.s32.totalorder %s1230, 7
      %s1234 = scalar_select %p1233, %s1230, 7
      %s1235 = smul.addr %s1232, 8
      %s1236 = sadd.s32 %s1234, %s1235
      %s1237 = smul.addr %s1236, 4
      %s1238 = scalar_lea.vmem %s7, %s1237
      %p1239 = scmp.lt.s32.totalorder %s25, 1
      %s1240 = scalar_select %p1239, %s25, 1
      %p1241 = scmp.lt.s32.totalorder %s26, 1
      %s1242 = scalar_select %p1241, %s26, 1
      %s1243 = smul.addr %s1240, 2
      %s1244 = sadd.s32 %s1242, %s1243
      %s1245 = scalar_lea.vmem %s8, %s1244
      %p1246 = scmp.lt.s32.totalorder %s25, 1
      %s1247 = scalar_select %p1246, %s25, 1
      %p1248 = scmp.lt.s32.totalorder %s26, 1
      %s1249 = scalar_select %p1248, %s26, 1
      %s1250 = smul.addr %s1247, 2
      %s1251 = sadd.s32 %s1249, %s1250
      %s1252 = scalar_lea.vmem %s9, %s1251
      // Predicated region
      $region53: #{conv_module_forward.2} parent=47 // pred_check
        %p1253 = pneg %p244
      $region54: #{conv_module_forward.2} parent=47 // pred_check_branch
        %1255 = sbr.rel (%p1253) target = $region56
      $region55: #{conv_module_forward.2} parent=47 // pred_region
        %s1256 = smul.u32 4, %s26
      $region56: #{conv_module_forward.2} parent=47 // pred_fallthru
        _
      // Predicated region
      $region57: #{conv_module_forward.2} parent=47 // pred_check
        %p1257 = pneg %p272
      $region58: #{conv_module_forward.2} parent=47 // pred_check_branch
        %1259 = sbr.rel (%p1257) target = $region60
      $region59: #{conv_module_forward.2} parent=47 // pred_region
        _
      $region60: #{conv_module_forward.2} parent=47 // pred_fallthru
        _
      // Predicated region
      $region61: #{conv_module_forward.2} parent=47 // pred_check
        %p1260 = pneg %p300
      $region62: #{conv_module_forward.2} parent=47 // pred_check_branch
        %1262 = sbr.rel (%p1260) target = $region64
      $region63: #{conv_module_forward.2} parent=47 // pred_region
        _
      $region64: #{conv_module_forward.2} parent=47 // pred_fallthru
        _
    $region48: #{conv_module_forward.2} parent=5 // pred_fallthru
      _
    %p1263 = scmp.le.s32.totalorder 2, %s16
    // Predicated region
    $region65: #{conv_module_forward.2} parent=5 // pred_check
      %p1264 = pneg %p1263
    $region66: #{conv_module_forward.2} parent=5 // pred_check_branch
      %1266 = sbr.rel (%p1264) target = $region68
    $region67: #{conv_module_forward.2} parent=5 // pred_region
      %s1267 = ssub.s32 %s16, 2
      // Predicated region
      $region69: #{conv_module_forward.2} parent=67 // pred_check
        %p1268 = pneg %p250
      $region70: #{conv_module_forward.2} parent=67 // pred_check_branch
        %1270 = sbr.rel (%p1268) target = $region72
      $region71: #{conv_module_forward.2} parent=67 // pred_region
        %s1271 = smul.u32 4, %s28
        %p1272 = scmp.lt.s32.totalorder %s27, 1
        %s1273 = scalar_select %p1272, %s27, 1
        %p1274 = scmp.lt.s32.totalorder %s1271, 7
        %s1275 = scalar_select %p1274, %s1271, 7
        %s1276 = smul.addr %s1273, 8
        %s1277 = sadd.s32 %s1275, %s1276
        %s1278 = smul.addr %s1277, 4
        %s1279 = scalar_lea.vmem %s7, %s1278
      $region72: #{conv_module_forward.2} parent=67 // pred_fallthru
        _
      // Predicated region
      $region73: #{conv_module_forward.2} parent=67 // pred_check
        %p1280 = pneg %p278
      $region74: #{conv_module_forward.2} parent=67 // pred_check_branch
        %1282 = sbr.rel (%p1280) target = $region76
      $region75: #{conv_module_forward.2} parent=67 // pred_region
        %p1283 = scmp.lt.s32.totalorder %s27, 1
        %s1284 = scalar_select %p1283, %s27, 1
        %p1285 = scmp.lt.s32.totalorder %s28, 1
        %s1286 = scalar_select %p1285, %s28, 1
        %s1287 = smul.addr %s1284, 2
        %s1288 = sadd.s32 %s1286, %s1287
        %s1289 = scalar_lea.vmem %s8, %s1288
      $region76: #{conv_module_forward.2} parent=67 // pred_fallthru
        _
      // Predicated region
      $region77: #{conv_module_forward.2} parent=67 // pred_check
        %p1290 = pneg %p306
      $region78: #{conv_module_forward.2} parent=67 // pred_check_branch
        %1292 = sbr.rel (%p1290) target = $region80
      $region79: #{conv_module_forward.2} parent=67 // pred_region
        %p1293 = scmp.lt.s32.totalorder %s27, 1
        %s1294 = scalar_select %p1293, %s27, 1
        %p1295 = scmp.lt.s32.totalorder %s28, 1
        %s1296 = scalar_select %p1295, %s28, 1
        %s1297 = smul.addr %s1294, 2
        %s1298 = sadd.s32 %s1296, %s1297
        %s1299 = scalar_lea.vmem %s9, %s1298
      $region80: #{conv_module_forward.2} parent=67 // pred_fallthru
        _
    $region68: #{conv_module_forward.2} parent=5 // pred_fallthru
      _
  $region6: #{conv_module_forward.2} parent=0 // loop_footer
    %s20 = sadd.s32 1, %s16
  $region7: #{conv_module_forward.2} parent=0 // loop_footer_branch
    %15 = sbr.rel target = $region3
  $region8: #{conv_module_forward.2} parent=0 // loop_exit
    _

</llo_original>
